<compile_context>
chip_gen: v7x
topology: tpu7x:2x2x1
jax: 0.10.0
libtpu: 0.0.40
codegen_flags: <defaults>
</compile_context>

<pallas_src>
import numpy as np
import jax
import jax.numpy as jnp
from jax.experimental import pallas as pl
from jax.experimental.pallas import tpu as pltpu

# ----- model hyper-parameters (small, consistent with Caser.__init__) -----
LOOKBACK = 8           # L   (power of two -> tree time-max)
EMB_SIZE = 32          # E
NUM_HOR_FILTERS = 4    # Fh
NUM_VER_FILTERS = 4    # Fv
NUM_ITEMS = 50
NUM_USERS = 10
DROP_RATE = 0.1        # unused at inference
ACT_CONV = "ReLU"
ACT_FC = "ReLU"

BATCH = 2
NUM_POSS = 6           # P (candidate items per batch row)

_LE = LOOKBACK * EMB_SIZE                      # 256
_LFH = LOOKBACK * NUM_HOR_FILTERS              # 32
_KDIM = _LE + 8                                # 264: ones-lane at _LE, zero pad
_NBIG = LOOKBACK * _LFH + EMB_SIZE             # 288: [horiz cols | fc1-v cols]
OUT_LANES = 128                                # lane-dense output width


def _ru8(n):
    return -(-n // 8) * 8


# AUX slab row offsets (static).
ITEM_ROW0 = _ru8(_LFH)                         # 32
USER_ROW0 = ITEM_ROW0 + NUM_ITEMS + 1          # 83
W2B_ROW0 = _ru8(USER_ROW0 + NUM_USERS + 1)     # 96
AUX_ROWS = _ru8(W2B_ROW0 + NUM_ITEMS + 1)      # 152

assert (LOOKBACK & (LOOKBACK - 1)) == 0, "tree time-max assumes L is a power of two"
assert ACT_CONV == "ReLU", "-1e30 column masking relies on act_conv == ReLU (outputs >= 0)"
assert ACT_FC == "ReLU"
assert BATCH * NUM_POSS <= OUT_LANES


def caser_kernel(seq_ref, poss_ref, user_ref,      # SMEM scalar-prefetch refs
                 w_ref, aux_ref,                   # static VMEM weight slabs
                 out_ref,                          # (B, 128) lane-dense scores
                 x_scr, xcat_scr, g_scr):          # VMEM scratch
    E, Fh = EMB_SIZE, NUM_HOR_FILTERS
    B, L = seq_ref.shape
    P = poss_ref.shape[1]
    LE, LFh = L * E, L * Fh

    # ---- 1. init scratches.  The ==LE / ==2E lanes are constant-1 lanes that
    #         fold bias_all/b1_eff (via W_slab's extra row) and b2 (via the
    #         gathered [W2 | b2] rows) into the two MXU passes for free.
    x_lane = jax.lax.broadcasted_iota(jnp.int32, x_scr.shape, 1)
    x_scr[...] = (x_lane == LE).astype(jnp.float32)
    c_lane = jax.lax.broadcasted_iota(jnp.int32, xcat_scr.shape, 1)
    xcat_scr[...] = (c_lane == 2 * E).astype(jnp.float32)
    g_scr[...] = jnp.zeros_like(g_scr)

    # ---- 2. in-kernel gathers: indices come from SMEM (scalar prefetch),
    #         tables are static VMEM rows (dynamic sublane reads).
    for b in range(B):
        for t in range(L):
            row = ITEM_ROW0 + seq_ref[b, t]
            x_scr[b:b + 1, t * E:(t + 1) * E] = aux_ref[pl.ds(row, 1), 0:E]
        urow = USER_ROW0 + user_ref[b]
        xcat_scr[b:b + 1, E:2 * E] = aux_ref[pl.ds(urow, 1), 0:E]
    for j in range(B):
        for p in range(P):
            row = W2B_ROW0 + poss_ref[j, p]
            g_scr[j * P + p:j * P + p + 1, :] = aux_ref[pl.ds(row, 1), :]

    # ---- 3. one fused bf16 MXU pass (f32 accumulation):
    #         [emb_flat | 1] @ [W_all | W1v_eff ; bias_all | b1_eff]
    big = jnp.dot(x_scr[...].astype(jnp.bfloat16), w_ref[...],
                  preferred_element_type=jnp.float32)             # (B, 288)

    # ---- 4. horizontal branch: ReLU, then max over the time axis.
    #         Invalid (h, t) columns carry a -1e30 bias -> ReLU clamps them to
    #         0 which can never beat valid (>= 0) entries (ReLU-only trick).
    h_act = jnp.maximum(big[:, 0:LE], 0.0)                        # (B, 256)
    half = LE // 2
    m = jnp.maximum(h_act[:, 0:half], h_act[:, half:LE])          # vreg-aligned
    span = half
    while span > LFh:
        span //= 2
        m = jnp.maximum(m, pltpu.roll(m, shift=span, axis=1))     # XLU rotate
    out_h = m[:, 0:LFh]                                           # (B, L*Fh)

    # ---- 5. fc1 + ReLU (vertical conv + all biases already folded into 'big').
    z = jnp.maximum(
        big[:, LE:LE + E]
        + jnp.dot(out_h, aux_ref[0:LFh, 0:E],
                  preferred_element_type=jnp.float32), 0.0)       # (B, E)
    # TODO(synk): training-mode dropout (random mask / 1/(1-p) scaling) not implemented.
    xcat_scr[:, 0:E] = z

    # ---- 6. scoring: single dot of [z | uemb | 1] against the gathered
    #         [W2 | b2 | 0...] candidate rows (unused g rows are zero).
    res = jax.lax.dot_general(xcat_scr[...], g_scr[...],
                              (((1,), (1,)), ((), ())),
                              preferred_element_type=jnp.float32)  # (B, 128)
    out_ref[...] = res


def init_params(key):
    E, L, Fv, Fh = EMB_SIZE, LOOKBACK, NUM_VER_FILTERS, NUM_HOR_FILTERS
    D = Fv * E + Fh * L
    ks = jax.random.split(key, 10)
    p = {}
    p["user_emb"] = jax.random.normal(ks[0], (NUM_USERS + 1, E), jnp.float32) * 0.1
    p["item_emb"] = jax.random.normal(ks[1], (NUM_ITEMS + 1, E), jnp.float32) * 0.1
    p["wv"] = jax.random.normal(ks[2], (Fv, L), jnp.float32) * 0.1       # Conv2d(1,Fv,(L,1))
    p["bv"] = jax.random.normal(ks[3], (Fv,), jnp.float32) * 0.1
    p["wh"] = [jax.random.normal(jax.random.fold_in(ks[4], h), (Fh, h + 1, E), jnp.float32) * 0.1
               for h in range(L)]                                         # Conv2d(1,Fh,(h+1,E))
    p["bh"] = jax.random.normal(ks[5], (L, Fh), jnp.float32) * 0.1
    p["w1"] = jax.random.normal(ks[6], (E, D), jnp.float32) * 0.1         # fc1
    p["b1"] = jax.random.normal(ks[7], (E,), jnp.float32) * 0.1
    p["W2"] = jax.random.normal(ks[8], (NUM_ITEMS + 1, 2 * E), jnp.float32) * 0.1
    p["b2"] = jax.random.normal(ks[9], (NUM_ITEMS + 1, 1), jnp.float32) * 0.1
    return p


def pack_static_weights(params):
    """One-time host packing of ALL static slabs (off the per-call path)."""
    E, L, Fv, Fh = EMB_SIZE, LOOKBACK, NUM_VER_FILTERS, NUM_HOR_FILTERS
    LE, LFh = L * E, L * Fh
    NI, NU = NUM_ITEMS + 1, NUM_USERS + 1

    w1 = np.asarray(params["w1"])
    wv = np.asarray(params["wv"])
    bv = np.asarray(params["bv"])
    b1 = np.asarray(params["b1"])
    bh = np.asarray(params["bh"])

    # Horizontal convs as one shifted/zero-padded matrix; col = t*LFh + h*Fh + f.
    W_all = np.zeros((LE, L * LFh), np.float32)
    bias_all = np.full((L * LFh,), -1e30, np.float32)   # invalid (h,t) slots (ReLU trick)
    for h in range(L):
        kh = h + 1
        wh = np.asarray(params["wh"][h])                # (Fh, kh, E)
        blk = wh.transpose(1, 2, 0).reshape(kh * E, Fh)  # [(k,e), f]
        for t in range(L - kh + 1):
            c0 = t * LFh + h * Fh
            W_all[t * E:(t + kh) * E, c0:c0 + Fh] = blk
            bias_all[c0:c0 + Fh] = bh[h]

    # Fold the vertical conv (+ its bias) into fc1's v-part.
    w1v = w1[:, :Fv * E].reshape(E, Fv, E)                               # [o, f, e]
    W1v_eff = np.einsum("fl,ofe->leo", wv, w1v).reshape(LE, E)
    b1_eff = b1 + np.einsum("f,ofe->o", bv, w1v)
    W1h = np.ascontiguousarray(w1[:, Fv * E:].T)                         # (L*Fh, E)

    # Slab 1 (bf16): [W_all | W1v_eff] with ONE bias row at row LE (+ zero pad).
    W_np = np.zeros((_KDIM, _NBIG), np.float32)
    W_np[:LE, :L * LFh] = W_all
    W_np[:LE, L * LFh:] = W1v_eff
    W_np[LE, :L * LFh] = bias_all
    W_np[LE, L * LFh:] = b1_eff

    # Slab 2 (f32, 128 lanes): W1h + embedding tables + [W2 | b2] scoring rows.
    aux = np.zeros((AUX_ROWS, OUT_LANES), np.float32)
    aux[:LFh, :E] = W1h
    aux[ITEM_ROW0:ITEM_ROW0 + NI, :E] = np.asarray(params["item_emb"])
    aux[USER_ROW0:USER_ROW0 + NU, :E] = np.asarray(params["user_emb"])
    aux[W2B_ROW0:W2B_ROW0 + NI, :2 * E] = np.asarray(params["W2"])
    aux[W2B_ROW0:W2B_ROW0 + NI, 2 * E] = np.asarray(params["b2"])[:, 0]

    return {"W_slab": jnp.asarray(W_np, dtype=jnp.bfloat16),
            "AUX": jnp.asarray(aux, dtype=jnp.float32)}


@jax.jit
def caser_forward(w_slab, aux_tab, input_seqs, poss_item_seqs, user_var):
    B, P = poss_item_seqs.shape
    assert B * P <= OUT_LANES
    K, NBIG = w_slab.shape
    AUXR, LANES = aux_tab.shape

    grid_spec = pltpu.PrefetchScalarGridSpec(
        num_scalar_prefetch=3,                 # input_seqs, poss_item_seqs, user_var
        grid=(1,),                             # single grid point is right at B=2
        in_specs=[
            pl.BlockSpec((K, NBIG), lambda i, *_: (0, 0)),     # W_slab (bf16)
            pl.BlockSpec((AUXR, LANES), lambda i, *_: (0, 0)),  # AUX (f32)
        ],
        out_specs=pl.BlockSpec((B, OUT_LANES), lambda i, *_: (0, 0)),
        scratch_shapes=[
            pltpu.VMEM((B, K), jnp.float32),                    # x_scr
            pltpu.VMEM((B, OUT_LANES), jnp.float32),            # xcat_scr
            pltpu.VMEM((OUT_LANES, OUT_LANES), jnp.float32),    # g_scr
        ],
    )
    res_pad = pl.pallas_call(
        caser_kernel,
        out_shape=jax.ShapeDtypeStruct((B, OUT_LANES), jnp.float32),
        grid_spec=grid_spec,
        compiler_params=pltpu.CompilerParams(
            dimension_semantics=("arbitrary",)),
    )(input_seqs.astype(jnp.int32), poss_item_seqs.astype(jnp.int32),
      user_var.astype(jnp.int32), w_slab, aux_tab)

    # PyTorch's broadcasting quirk yields shape (B, B, P); the only per-call
    # host work left is this slice+reshape of the lane-dense kernel output.
    return res_pad[:, :B * P].reshape(B, B, P)


def caser_reference(params, input_seqs, poss_item_seqs, user_var):
    """Pure-JAX (f32) reference mirroring the PyTorch forward exactly."""
    E, L, Fv, Fh = EMB_SIZE, LOOKBACK, NUM_VER_FILTERS, NUM_HOR_FILTERS
    B, P = poss_item_seqs.shape
    emb = params["item_emb"][input_seqs]
    uemb = params["user_emb"][user_var]
    out_v = jnp.einsum("fl,ble->bfe", params["wv"], emb) + params["bv"][None, :, None]
    out_v = out_v.reshape(B, Fv * E)
    parts = []
    for h in range(L):
        kh = h + 1
        W = params["wh"][h]
        conv = jnp.stack(
            [jnp.einsum("bke,fke->bf", emb[:, t:t + kh, :], W) for t in range(L - kh + 1)],
            axis=1) + params["bh"][h][None, None, :]
        conv = jnp.maximum(conv, 0.0)
        parts.append(conv.max(axis=1))
    out_h = jnp.concatenate(parts, axis=1)
    feat = jnp.concatenate([out_v, out_h], axis=1)
    z = jnp.maximum(feat @ params["w1"].T + params["b1"], 0.0)
    x = jnp.concatenate([z, uemb], axis=1)
    w2 = params["W2"][poss_item_seqs]           # (B, P, 2E)
    b2 = params["b2"][poss_item_seqs][..., 0]   # (B, P)
    return jnp.einsum("id,jpd->ijp", x, w2) + b2[None]


if __name__ == "__main__":
    key = jax.random.PRNGKey(0)
    pkey, k1, k2, k3 = jax.random.split(key, 4)
    params = init_params(pkey)
    packed = pack_static_weights(params)   # built once, reused for every call

    input_seqs = jax.random.randint(k1, (BATCH, LOOKBACK), 0, NUM_ITEMS + 1, jnp.int32)
    poss_item_seqs = jax.random.randint(k2, (BATCH, NUM_POSS), 0, NUM_ITEMS + 1, jnp.int32)
    user_var = jax.random.randint(k3, (BATCH,), 0, NUM_USERS + 1, jnp.int32)

    res = jax.block_until_ready(
        caser_forward(packed["W_slab"], packed["AUX"],
                      input_seqs, poss_item_seqs, user_var))

    ref = caser_reference(params, input_seqs, poss_item_seqs, user_var)
    assert res.shape == (BATCH, BATCH, NUM_POSS), res.shape
    max_err = float(jnp.abs(res - ref).max())
    # bf16 weight slab (f32 accumulation) -> loosened tolerance per review note.
    assert jnp.allclose(res, ref, atol=2e-2, rtol=2e-2), max_err
    print("KERNEL_OK")
</pallas_src>

<mosaic_0001>
module attributes {stable_mosaic.version = 11 : i64} {
  func.func @caser_kernel(%arg0: i32, %arg1: memref<2x8xi32, #tpu.memory_space<smem>>, %arg2: memref<2x6xi32, #tpu.memory_space<smem>>, %arg3: memref<2xi32, #tpu.memory_space<smem>>, %arg4: memref<264x288xbf16, #tpu.memory_space<vmem>>, %arg5: memref<152x128xf32, #tpu.memory_space<vmem>>, %arg6: memref<2x128xf32, #tpu.memory_space<vmem>>, %arg7: memref<2x264xf32, #tpu.memory_space<vmem>>, %arg8: memref<2x128xf32, #tpu.memory_space<vmem>>, %arg9: memref<128x128xf32, #tpu.memory_space<vmem>>) attributes {dimension_semantics = [#tpu.dimension_semantics<arbitrary>], iteration_bounds = array<i64: 1>, scalar_prefetch = 3 : i64, scratch_operands = 3 : i64, tpu.core_type = #tpu.core_type<tc>, window_params = [{pipeline_mode = #tpu.pipeline_mode<synchronous>, transform_indices = @transform_0, window_bounds = array<i64: 264, 288>}, {pipeline_mode = #tpu.pipeline_mode<synchronous>, transform_indices = @transform_1, window_bounds = array<i64: 152, 128>}, {pipeline_mode = #tpu.pipeline_mode<synchronous>, transform_indices = @transform_2, window_bounds = array<i64: 2, 128>}]} {
    %0 = tpu.iota {dimensions = array<i32: 1>} : vector<2x264xi32>
    %c256_i32 = arith.constant 256 : i32
    %1 = vector.broadcast %c256_i32 : i32 to vector<2x264xi32>
    %2 = arith.cmpi eq, %0, %1 : vector<2x264xi32>
    %3 = arith.extui %2 : vector<2x264xi1> to vector<2x264xi32>
    %4 = arith.sitofp %3 : vector<2x264xi32> to vector<2x264xf32>
    %c0 = arith.constant 0 : index
    %c0_0 = arith.constant 0 : index
    %5 = vector.load %arg7[%c0, %c0_0] : memref<2x264xf32, #tpu.memory_space<vmem>>, vector<2x264xf32>
    tpu.vector_store %arg7[%c0, %c0_0], %4 {strides = array<i32>} : memref<2x264xf32, #tpu.memory_space<vmem>>, vector<2x264xf32>,
    %6 = tpu.iota {dimensions = array<i32: 1>} : vector<2x128xi32>
    %c64_i32 = arith.constant 64 : i32
    %7 = vector.broadcast %c64_i32 : i32 to vector<2x128xi32>
    %8 = arith.cmpi eq, %6, %7 : vector<2x128xi32>
    %9 = arith.extui %8 : vector<2x128xi1> to vector<2x128xi32>
    %10 = arith.sitofp %9 : vector<2x128xi32> to vector<2x128xf32>
    %c0_1 = arith.constant 0 : index
    %c0_2 = arith.constant 0 : index
    %11 = vector.load %arg8[%c0_1, %c0_2] : memref<2x128xf32, #tpu.memory_space<vmem>>, vector<2x128xf32>
    tpu.vector_store %arg8[%c0_1, %c0_2], %10 {strides = array<i32>} : memref<2x128xf32, #tpu.memory_space<vmem>>, vector<2x128xf32>,
    %cst = arith.constant 0.000000e+00 : f32
    %12 = vector.broadcast %cst : f32 to vector<128x128xf32>
    %c0_3 = arith.constant 0 : index
    %c0_4 = arith.constant 0 : index
    %13 = vector.load %arg9[%c0_3, %c0_4] : memref<128x128xf32, #tpu.memory_space<vmem>>, vector<128x128xf32>
    tpu.vector_store %arg9[%c0_3, %c0_4], %12 {strides = array<i32>} : memref<128x128xf32, #tpu.memory_space<vmem>>, vector<128x128xf32>,
    %c0_5 = arith.constant 0 : index
    %c0_6 = arith.constant 0 : index
    %14 = memref.load %arg1[%c0_5, %c0_6] : memref<2x8xi32, #tpu.memory_space<smem>>
    %c32_i32 = arith.constant 32 : i32
    %15 = arith.addi %c32_i32, %14 : i32
    %16 = arith.index_cast %15 : i32 to index
    %c0_7 = arith.constant 0 : index
    %17 = vector.load %arg5[%16, %c0_7] : memref<152x128xf32, #tpu.memory_space<vmem>>, vector<1x32xf32>
    %c0_8 = arith.constant 0 : index
    %c0_9 = arith.constant 0 : index
    %18 = vector.load %arg7[%c0_8, %c0_9] : memref<2x264xf32, #tpu.memory_space<vmem>>, vector<1x32xf32>
    tpu.vector_store %arg7[%c0_8, %c0_9], %17 {strides = array<i32>} : memref<2x264xf32, #tpu.memory_space<vmem>>, vector<1x32xf32>,
    %c0_10 = arith.constant 0 : index
    %c1 = arith.constant 1 : index
    %19 = memref.load %arg1[%c0_10, %c1] : memref<2x8xi32, #tpu.memory_space<smem>>
    %c32_i32_11 = arith.constant 32 : i32
    %20 = arith.addi %c32_i32_11, %19 : i32
    %21 = arith.index_cast %20 : i32 to index
    %c0_12 = arith.constant 0 : index
    %22 = vector.load %arg5[%21, %c0_12] : memref<152x128xf32, #tpu.memory_space<vmem>>, vector<1x32xf32>
    %c0_13 = arith.constant 0 : index
    %c32 = arith.constant 32 : index
    %23 = vector.load %arg7[%c0_13, %c32] : memref<2x264xf32, #tpu.memory_space<vmem>>, vector<1x32xf32>
    tpu.vector_store %arg7[%c0_13, %c32], %22 {strides = array<i32>} : memref<2x264xf32, #tpu.memory_space<vmem>>, vector<1x32xf32>,
    %c0_14 = arith.constant 0 : index
    %c2 = arith.constant 2 : index
    %24 = memref.load %arg1[%c0_14, %c2] : memref<2x8xi32, #tpu.memory_space<smem>>
    %c32_i32_15 = arith.constant 32 : i32
    %25 = arith.addi %c32_i32_15, %24 : i32
    %26 = arith.index_cast %25 : i32 to index
    %c0_16 = arith.constant 0 : index
    %27 = vector.load %arg5[%26, %c0_16] : memref<152x128xf32, #tpu.memory_space<vmem>>, vector<1x32xf32>
    %c0_17 = arith.constant 0 : index
    %c64 = arith.constant 64 : index
    %28 = vector.load %arg7[%c0_17, %c64] : memref<2x264xf32, #tpu.memory_space<vmem>>, vector<1x32xf32>
    tpu.vector_store %arg7[%c0_17, %c64], %27 {strides = array<i32>} : memref<2x264xf32, #tpu.memory_space<vmem>>, vector<1x32xf32>,
    %c0_18 = arith.constant 0 : index
    %c3 = arith.constant 3 : index
    %29 = memref.load %arg1[%c0_18, %c3] : memref<2x8xi32, #tpu.memory_space<smem>>
    %c32_i32_19 = arith.constant 32 : i32
    %30 = arith.addi %c32_i32_19, %29 : i32
    %31 = arith.index_cast %30 : i32 to index
    %c0_20 = arith.constant 0 : index
    %32 = vector.load %arg5[%31, %c0_20] : memref<152x128xf32, #tpu.memory_space<vmem>>, vector<1x32xf32>
    %c0_21 = arith.constant 0 : index
    %c96 = arith.constant 96 : index
    %33 = vector.load %arg7[%c0_21, %c96] : memref<2x264xf32, #tpu.memory_space<vmem>>, vector<1x32xf32>
    tpu.vector_store %arg7[%c0_21, %c96], %32 {strides = array<i32>} : memref<2x264xf32, #tpu.memory_space<vmem>>, vector<1x32xf32>,
    %c0_22 = arith.constant 0 : index
    %c4 = arith.constant 4 : index
    %34 = memref.load %arg1[%c0_22, %c4] : memref<2x8xi32, #tpu.memory_space<smem>>
    %c32_i32_23 = arith.constant 32 : i32
    %35 = arith.addi %c32_i32_23, %34 : i32
    %36 = arith.index_cast %35 : i32 to index
    %c0_24 = arith.constant 0 : index
    %37 = vector.load %arg5[%36, %c0_24] : memref<152x128xf32, #tpu.memory_space<vmem>>, vector<1x32xf32>
    %c0_25 = arith.constant 0 : index
    %c128 = arith.constant 128 : index
    %38 = vector.load %arg7[%c0_25, %c128] : memref<2x264xf32, #tpu.memory_space<vmem>>, vector<1x32xf32>
    tpu.vector_store %arg7[%c0_25, %c128], %37 {strides = array<i32>} : memref<2x264xf32, #tpu.memory_space<vmem>>, vector<1x32xf32>,
    %c0_26 = arith.constant 0 : index
    %c5 = arith.constant 5 : index
    %39 = memref.load %arg1[%c0_26, %c5] : memref<2x8xi32, #tpu.memory_space<smem>>
    %c32_i32_27 = arith.constant 32 : i32
    %40 = arith.addi %c32_i32_27, %39 : i32
    %41 = arith.index_cast %40 : i32 to index
    %c0_28 = arith.constant 0 : index
    %42 = vector.load %arg5[%41, %c0_28] : memref<152x128xf32, #tpu.memory_space<vmem>>, vector<1x32xf32>
    %c0_29 = arith.constant 0 : index
    %c160 = arith.constant 160 : index
    %43 = vector.load %arg7[%c0_29, %c160] : memref<2x264xf32, #tpu.memory_space<vmem>>, vector<1x32xf32>
    tpu.vector_store %arg7[%c0_29, %c160], %42 {strides = array<i32>} : memref<2x264xf32, #tpu.memory_space<vmem>>, vector<1x32xf32>,
    %c0_30 = arith.constant 0 : index
    %c6 = arith.constant 6 : index
    %44 = memref.load %arg1[%c0_30, %c6] : memref<2x8xi32, #tpu.memory_space<smem>>
    %c32_i32_31 = arith.constant 32 : i32
    %45 = arith.addi %c32_i32_31, %44 : i32
    %46 = arith.index_cast %45 : i32 to index
    %c0_32 = arith.constant 0 : index
    %47 = vector.load %arg5[%46, %c0_32] : memref<152x128xf32, #tpu.memory_space<vmem>>, vector<1x32xf32>
    %c0_33 = arith.constant 0 : index
    %c192 = arith.constant 192 : index
    %48 = vector.load %arg7[%c0_33, %c192] : memref<2x264xf32, #tpu.memory_space<vmem>>, vector<1x32xf32>
    tpu.vector_store %arg7[%c0_33, %c192], %47 {strides = array<i32>} : memref<2x264xf32, #tpu.memory_space<vmem>>, vector<1x32xf32>,
    %c0_34 = arith.constant 0 : index
    %c7 = arith.constant 7 : index
    %49 = memref.load %arg1[%c0_34, %c7] : memref<2x8xi32, #tpu.memory_space<smem>>
    %c32_i32_35 = arith.constant 32 : i32
    %50 = arith.addi %c32_i32_35, %49 : i32
    %51 = arith.index_cast %50 : i32 to index
    %c0_36 = arith.constant 0 : index
    %52 = vector.load %arg5[%51, %c0_36] : memref<152x128xf32, #tpu.memory_space<vmem>>, vector<1x32xf32>
    %c0_37 = arith.constant 0 : index
    %c224 = arith.constant 224 : index
    %53 = vector.load %arg7[%c0_37, %c224] : memref<2x264xf32, #tpu.memory_space<vmem>>, vector<1x32xf32>
    tpu.vector_store %arg7[%c0_37, %c224], %52 {strides = array<i32>} : memref<2x264xf32, #tpu.memory_space<vmem>>, vector<1x32xf32>,
    %c0_38 = arith.constant 0 : index
    %54 = memref.load %arg3[%c0_38] : memref<2xi32, #tpu.memory_space<smem>>
    %c83_i32 = arith.constant 83 : i32
    %55 = arith.addi %c83_i32, %54 : i32
    %56 = arith.index_cast %55 : i32 to index
    %c0_39 = arith.constant 0 : index
    %57 = vector.load %arg5[%56, %c0_39] : memref<152x128xf32, #tpu.memory_space<vmem>>, vector<1x32xf32>
    %c0_40 = arith.constant 0 : index
    %c32_41 = arith.constant 32 : index
    %58 = vector.load %arg8[%c0_40, %c32_41] : memref<2x128xf32, #tpu.memory_space<vmem>>, vector<1x32xf32>
    tpu.vector_store %arg8[%c0_40, %c32_41], %57 {strides = array<i32>} : memref<2x128xf32, #tpu.memory_space<vmem>>, vector<1x32xf32>,
    %c1_42 = arith.constant 1 : index
    %c0_43 = arith.constant 0 : index
    %59 = memref.load %arg1[%c1_42, %c0_43] : memref<2x8xi32, #tpu.memory_space<smem>>
    %c32_i32_44 = arith.constant 32 : i32
    %60 = arith.addi %c32_i32_44, %59 : i32
    %61 = arith.index_cast %60 : i32 to index
    %c0_45 = arith.constant 0 : index
    %62 = vector.load %arg5[%61, %c0_45] : memref<152x128xf32, #tpu.memory_space<vmem>>, vector<1x32xf32>
    %c1_46 = arith.constant 1 : index
    %c0_47 = arith.constant 0 : index
    %63 = vector.load %arg7[%c1_46, %c0_47] : memref<2x264xf32, #tpu.memory_space<vmem>>, vector<1x32xf32>
    tpu.vector_store %arg7[%c1_46, %c0_47], %62 {strides = array<i32>} : memref<2x264xf32, #tpu.memory_space<vmem>>, vector<1x32xf32>,
    %c1_48 = arith.constant 1 : index
    %c1_49 = arith.constant 1 : index
    %64 = memref.load %arg1[%c1_48, %c1_49] : memref<2x8xi32, #tpu.memory_space<smem>>
    %c32_i32_50 = arith.constant 32 : i32
    %65 = arith.addi %c32_i32_50, %64 : i32
    %66 = arith.index_cast %65 : i32 to index
    %c0_51 = arith.constant 0 : index
    %67 = vector.load %arg5[%66, %c0_51] : memref<152x128xf32, #tpu.memory_space<vmem>>, vector<1x32xf32>
    %c1_52 = arith.constant 1 : index
    %c32_53 = arith.constant 32 : index
    %68 = vector.load %arg7[%c1_52, %c32_53] : memref<2x264xf32, #tpu.memory_space<vmem>>, vector<1x32xf32>
    tpu.vector_store %arg7[%c1_52, %c32_53], %67 {strides = array<i32>} : memref<2x264xf32, #tpu.memory_space<vmem>>, vector<1x32xf32>,
    %c1_54 = arith.constant 1 : index
    %c2_55 = arith.constant 2 : index
    %69 = memref.load %arg1[%c1_54, %c2_55] : memref<2x8xi32, #tpu.memory_space<smem>>
    %c32_i32_56 = arith.constant 32 : i32
    %70 = arith.addi %c32_i32_56, %69 : i32
    %71 = arith.index_cast %70 : i32 to index
    %c0_57 = arith.constant 0 : index
    %72 = vector.load %arg5[%71, %c0_57] : memref<152x128xf32, #tpu.memory_space<vmem>>, vector<1x32xf32>
    %c1_58 = arith.constant 1 : index
    %c64_59 = arith.constant 64 : index
    %73 = vector.load %arg7[%c1_58, %c64_59] : memref<2x264xf32, #tpu.memory_space<vmem>>, vector<1x32xf32>
    tpu.vector_store %arg7[%c1_58, %c64_59], %72 {strides = array<i32>} : memref<2x264xf32, #tpu.memory_space<vmem>>, vector<1x32xf32>,
    %c1_60 = arith.constant 1 : index
    %c3_61 = arith.constant 3 : index
    %74 = memref.load %arg1[%c1_60, %c3_61] : memref<2x8xi32, #tpu.memory_space<smem>>
    %c32_i32_62 = arith.constant 32 : i32
    %75 = arith.addi %c32_i32_62, %74 : i32
    %76 = arith.index_cast %75 : i32 to index
    %c0_63 = arith.constant 0 : index
    %77 = vector.load %arg5[%76, %c0_63] : memref<152x128xf32, #tpu.memory_space<vmem>>, vector<1x32xf32>
    %c1_64 = arith.constant 1 : index
    %c96_65 = arith.constant 96 : index
    %78 = vector.load %arg7[%c1_64, %c96_65] : memref<2x264xf32, #tpu.memory_space<vmem>>, vector<1x32xf32>
    tpu.vector_store %arg7[%c1_64, %c96_65], %77 {strides = array<i32>} : memref<2x264xf32, #tpu.memory_space<vmem>>, vector<1x32xf32>,
    %c1_66 = arith.constant 1 : index
    %c4_67 = arith.constant 4 : index
    %79 = memref.load %arg1[%c1_66, %c4_67] : memref<2x8xi32, #tpu.memory_space<smem>>
    %c32_i32_68 = arith.constant 32 : i32
    %80 = arith.addi %c32_i32_68, %79 : i32
    %81 = arith.index_cast %80 : i32 to index
    %c0_69 = arith.constant 0 : index
    %82 = vector.load %arg5[%81, %c0_69] : memref<152x128xf32, #tpu.memory_space<vmem>>, vector<1x32xf32>
    %c1_70 = arith.constant 1 : index
    %c128_71 = arith.constant 128 : index
    %83 = vector.load %arg7[%c1_70, %c128_71] : memref<2x264xf32, #tpu.memory_space<vmem>>, vector<1x32xf32>
    tpu.vector_store %arg7[%c1_70, %c128_71], %82 {strides = array<i32>} : memref<2x264xf32, #tpu.memory_space<vmem>>, vector<1x32xf32>,
    %c1_72 = arith.constant 1 : index
    %c5_73 = arith.constant 5 : index
    %84 = memref.load %arg1[%c1_72, %c5_73] : memref<2x8xi32, #tpu.memory_space<smem>>
    %c32_i32_74 = arith.constant 32 : i32
    %85 = arith.addi %c32_i32_74, %84 : i32
    %86 = arith.index_cast %85 : i32 to index
    %c0_75 = arith.constant 0 : index
    %87 = vector.load %arg5[%86, %c0_75] : memref<152x128xf32, #tpu.memory_space<vmem>>, vector<1x32xf32>
    %c1_76 = arith.constant 1 : index
    %c160_77 = arith.constant 160 : index
    %88 = vector.load %arg7[%c1_76, %c160_77] : memref<2x264xf32, #tpu.memory_space<vmem>>, vector<1x32xf32>
    tpu.vector_store %arg7[%c1_76, %c160_77], %87 {strides = array<i32>} : memref<2x264xf32, #tpu.memory_space<vmem>>, vector<1x32xf32>,
    %c1_78 = arith.constant 1 : index
    %c6_79 = arith.constant 6 : index
    %89 = memref.load %arg1[%c1_78, %c6_79] : memref<2x8xi32, #tpu.memory_space<smem>>
    %c32_i32_80 = arith.constant 32 : i32
    %90 = arith.addi %c32_i32_80, %89 : i32
    %91 = arith.index_cast %90 : i32 to index
    %c0_81 = arith.constant 0 : index
    %92 = vector.load %arg5[%91, %c0_81] : memref<152x128xf32, #tpu.memory_space<vmem>>, vector<1x32xf32>
    %c1_82 = arith.constant 1 : index
    %c192_83 = arith.constant 192 : index
    %93 = vector.load %arg7[%c1_82, %c192_83] : memref<2x264xf32, #tpu.memory_space<vmem>>, vector<1x32xf32>
    tpu.vector_store %arg7[%c1_82, %c192_83], %92 {strides = array<i32>} : memref<2x264xf32, #tpu.memory_space<vmem>>, vector<1x32xf32>,
    %c1_84 = arith.constant 1 : index
    %c7_85 = arith.constant 7 : index
    %94 = memref.load %arg1[%c1_84, %c7_85] : memref<2x8xi32, #tpu.memory_space<smem>>
    %c32_i32_86 = arith.constant 32 : i32
    %95 = arith.addi %c32_i32_86, %94 : i32
    %96 = arith.index_cast %95 : i32 to index
    %c0_87 = arith.constant 0 : index
    %97 = vector.load %arg5[%96, %c0_87] : memref<152x128xf32, #tpu.memory_space<vmem>>, vector<1x32xf32>
    %c1_88 = arith.constant 1 : index
    %c224_89 = arith.constant 224 : index
    %98 = vector.load %arg7[%c1_88, %c224_89] : memref<2x264xf32, #tpu.memory_space<vmem>>, vector<1x32xf32>
    tpu.vector_store %arg7[%c1_88, %c224_89], %97 {strides = array<i32>} : memref<2x264xf32, #tpu.memory_space<vmem>>, vector<1x32xf32>,
    %c1_90 = arith.constant 1 : index
    %99 = memref.load %arg3[%c1_90] : memref<2xi32, #tpu.memory_space<smem>>
    %c83_i32_91 = arith.constant 83 : i32
    %100 = arith.addi %c83_i32_91, %99 : i32
    %101 = arith.index_cast %100 : i32 to index
    %c0_92 = arith.constant 0 : index
    %102 = vector.load %arg5[%101, %c0_92] : memref<152x128xf32, #tpu.memory_space<vmem>>, vector<1x32xf32>
    %c1_93 = arith.constant 1 : index
    %c32_94 = arith.constant 32 : index
    %103 = vector.load %arg8[%c1_93, %c32_94] : memref<2x128xf32, #tpu.memory_space<vmem>>, vector<1x32xf32>
    tpu.vector_store %arg8[%c1_93, %c32_94], %102 {strides = array<i32>} : memref<2x128xf32, #tpu.memory_space<vmem>>, vector<1x32xf32>,
    %c0_95 = arith.constant 0 : index
    %c0_96 = arith.constant 0 : index
    %104 = memref.load %arg2[%c0_95, %c0_96] : memref<2x6xi32, #tpu.memory_space<smem>>
    %c96_i32 = arith.constant 96 : i32
    %105 = arith.addi %c96_i32, %104 : i32
    %106 = arith.index_cast %105 : i32 to index
    %c0_97 = arith.constant 0 : index
    %107 = vector.load %arg5[%106, %c0_97] : memref<152x128xf32, #tpu.memory_space<vmem>>, vector<1x128xf32>
    %c0_98 = arith.constant 0 : index
    %c0_99 = arith.constant 0 : index
    %108 = vector.load %arg9[%c0_98, %c0_99] : memref<128x128xf32, #tpu.memory_space<vmem>>, vector<1x128xf32>
    tpu.vector_store %arg9[%c0_98, %c0_99], %107 {strides = array<i32>} : memref<128x128xf32, #tpu.memory_space<vmem>>, vector<1x128xf32>,
    %c0_100 = arith.constant 0 : index
    %c1_101 = arith.constant 1 : index
    %109 = memref.load %arg2[%c0_100, %c1_101] : memref<2x6xi32, #tpu.memory_space<smem>>
    %c96_i32_102 = arith.constant 96 : i32
    %110 = arith.addi %c96_i32_102, %109 : i32
    %111 = arith.index_cast %110 : i32 to index
    %c0_103 = arith.constant 0 : index
    %112 = vector.load %arg5[%111, %c0_103] : memref<152x128xf32, #tpu.memory_space<vmem>>, vector<1x128xf32>
    %c1_104 = arith.constant 1 : index
    %c0_105 = arith.constant 0 : index
    %113 = vector.load %arg9[%c1_104, %c0_105] : memref<128x128xf32, #tpu.memory_space<vmem>>, vector<1x128xf32>
    tpu.vector_store %arg9[%c1_104, %c0_105], %112 {strides = array<i32>} : memref<128x128xf32, #tpu.memory_space<vmem>>, vector<1x128xf32>,
    %c0_106 = arith.constant 0 : index
    %c2_107 = arith.constant 2 : index
    %114 = memref.load %arg2[%c0_106, %c2_107] : memref<2x6xi32, #tpu.memory_space<smem>>
    %c96_i32_108 = arith.constant 96 : i32
    %115 = arith.addi %c96_i32_108, %114 : i32
    %116 = arith.index_cast %115 : i32 to index
    %c0_109 = arith.constant 0 : index
    %117 = vector.load %arg5[%116, %c0_109] : memref<152x128xf32, #tpu.memory_space<vmem>>, vector<1x128xf32>
    %c2_110 = arith.constant 2 : index
    %c0_111 = arith.constant 0 : index
    %118 = vector.load %arg9[%c2_110, %c0_111] : memref<128x128xf32, #tpu.memory_space<vmem>>, vector<1x128xf32>
    tpu.vector_store %arg9[%c2_110, %c0_111], %117 {strides = array<i32>} : memref<128x128xf32, #tpu.memory_space<vmem>>, vector<1x128xf32>,
    %c0_112 = arith.constant 0 : index
    %c3_113 = arith.constant 3 : index
    %119 = memref.load %arg2[%c0_112, %c3_113] : memref<2x6xi32, #tpu.memory_space<smem>>
    %c96_i32_114 = arith.constant 96 : i32
    %120 = arith.addi %c96_i32_114, %119 : i32
    %121 = arith.index_cast %120 : i32 to index
    %c0_115 = arith.constant 0 : index
    %122 = vector.load %arg5[%121, %c0_115] : memref<152x128xf32, #tpu.memory_space<vmem>>, vector<1x128xf32>
    %c3_116 = arith.constant 3 : index
    %c0_117 = arith.constant 0 : index
    %123 = vector.load %arg9[%c3_116, %c0_117] : memref<128x128xf32, #tpu.memory_space<vmem>>, vector<1x128xf32>
    tpu.vector_store %arg9[%c3_116, %c0_117], %122 {strides = array<i32>} : memref<128x128xf32, #tpu.memory_space<vmem>>, vector<1x128xf32>,
    %c0_118 = arith.constant 0 : index
    %c4_119 = arith.constant 4 : index
    %124 = memref.load %arg2[%c0_118, %c4_119] : memref<2x6xi32, #tpu.memory_space<smem>>
    %c96_i32_120 = arith.constant 96 : i32
    %125 = arith.addi %c96_i32_120, %124 : i32
    %126 = arith.index_cast %125 : i32 to index
    %c0_121 = arith.constant 0 : index
    %127 = vector.load %arg5[%126, %c0_121] : memref<152x128xf32, #tpu.memory_space<vmem>>, vector<1x128xf32>
    %c4_122 = arith.constant 4 : index
    %c0_123 = arith.constant 0 : index
    %128 = vector.load %arg9[%c4_122, %c0_123] : memref<128x128xf32, #tpu.memory_space<vmem>>, vector<1x128xf32>
    tpu.vector_store %arg9[%c4_122, %c0_123], %127 {strides = array<i32>} : memref<128x128xf32, #tpu.memory_space<vmem>>, vector<1x128xf32>,
    %c0_124 = arith.constant 0 : index
    %c5_125 = arith.constant 5 : index
    %129 = memref.load %arg2[%c0_124, %c5_125] : memref<2x6xi32, #tpu.memory_space<smem>>
    %c96_i32_126 = arith.constant 96 : i32
    %130 = arith.addi %c96_i32_126, %129 : i32
    %131 = arith.index_cast %130 : i32 to index
    %c0_127 = arith.constant 0 : index
    %132 = vector.load %arg5[%131, %c0_127] : memref<152x128xf32, #tpu.memory_space<vmem>>, vector<1x128xf32>
    %c5_128 = arith.constant 5 : index
    %c0_129 = arith.constant 0 : index
    %133 = vector.load %arg9[%c5_128, %c0_129] : memref<128x128xf32, #tpu.memory_space<vmem>>, vector<1x128xf32>
    tpu.vector_store %arg9[%c5_128, %c0_129], %132 {strides = array<i32>} : memref<128x128xf32, #tpu.memory_space<vmem>>, vector<1x128xf32>,
    %c1_130 = arith.constant 1 : index
    %c0_131 = arith.constant 0 : index
    %134 = memref.load %arg2[%c1_130, %c0_131] : memref<2x6xi32, #tpu.memory_space<smem>>
    %c96_i32_132 = arith.constant 96 : i32
    %135 = arith.addi %c96_i32_132, %134 : i32
    %136 = arith.index_cast %135 : i32 to index
    %c0_133 = arith.constant 0 : index
    %137 = vector.load %arg5[%136, %c0_133] : memref<152x128xf32, #tpu.memory_space<vmem>>, vector<1x128xf32>
    %c6_134 = arith.constant 6 : index
    %c0_135 = arith.constant 0 : index
    %138 = vector.load %arg9[%c6_134, %c0_135] : memref<128x128xf32, #tpu.memory_space<vmem>>, vector<1x128xf32>
    tpu.vector_store %arg9[%c6_134, %c0_135], %137 {strides = array<i32>} : memref<128x128xf32, #tpu.memory_space<vmem>>, vector<1x128xf32>,
    %c1_136 = arith.constant 1 : index
    %c1_137 = arith.constant 1 : index
    %139 = memref.load %arg2[%c1_136, %c1_137] : memref<2x6xi32, #tpu.memory_space<smem>>
    %c96_i32_138 = arith.constant 96 : i32
    %140 = arith.addi %c96_i32_138, %139 : i32
    %141 = arith.index_cast %140 : i32 to index
    %c0_139 = arith.constant 0 : index
    %142 = vector.load %arg5[%141, %c0_139] : memref<152x128xf32, #tpu.memory_space<vmem>>, vector<1x128xf32>
    %c7_140 = arith.constant 7 : index
    %c0_141 = arith.constant 0 : index
    %143 = vector.load %arg9[%c7_140, %c0_141] : memref<128x128xf32, #tpu.memory_space<vmem>>, vector<1x128xf32>
    tpu.vector_store %arg9[%c7_140, %c0_141], %142 {strides = array<i32>} : memref<128x128xf32, #tpu.memory_space<vmem>>, vector<1x128xf32>,
    %c1_142 = arith.constant 1 : index
    %c2_143 = arith.constant 2 : index
    %144 = memref.load %arg2[%c1_142, %c2_143] : memref<2x6xi32, #tpu.memory_space<smem>>
    %c96_i32_144 = arith.constant 96 : i32
    %145 = arith.addi %c96_i32_144, %144 : i32
    %146 = arith.index_cast %145 : i32 to index
    %c0_145 = arith.constant 0 : index
    %147 = vector.load %arg5[%146, %c0_145] : memref<152x128xf32, #tpu.memory_space<vmem>>, vector<1x128xf32>
    %c8 = arith.constant 8 : index
    %c0_146 = arith.constant 0 : index
    %148 = vector.load %arg9[%c8, %c0_146] : memref<128x128xf32, #tpu.memory_space<vmem>>, vector<1x128xf32>
    tpu.vector_store %arg9[%c8, %c0_146], %147 {strides = array<i32>} : memref<128x128xf32, #tpu.memory_space<vmem>>, vector<1x128xf32>,
    %c1_147 = arith.constant 1 : index
    %c3_148 = arith.constant 3 : index
    %149 = memref.load %arg2[%c1_147, %c3_148] : memref<2x6xi32, #tpu.memory_space<smem>>
    %c96_i32_149 = arith.constant 96 : i32
    %150 = arith.addi %c96_i32_149, %149 : i32
    %151 = arith.index_cast %150 : i32 to index
    %c0_150 = arith.constant 0 : index
    %152 = vector.load %arg5[%151, %c0_150] : memref<152x128xf32, #tpu.memory_space<vmem>>, vector<1x128xf32>
    %c9 = arith.constant 9 : index
    %c0_151 = arith.constant 0 : index
    %153 = vector.load %arg9[%c9, %c0_151] : memref<128x128xf32, #tpu.memory_space<vmem>>, vector<1x128xf32>
    tpu.vector_store %arg9[%c9, %c0_151], %152 {strides = array<i32>} : memref<128x128xf32, #tpu.memory_space<vmem>>, vector<1x128xf32>,
    %c1_152 = arith.constant 1 : index
    %c4_153 = arith.constant 4 : index
    %154 = memref.load %arg2[%c1_152, %c4_153] : memref<2x6xi32, #tpu.memory_space<smem>>
    %c96_i32_154 = arith.constant 96 : i32
    %155 = arith.addi %c96_i32_154, %154 : i32
    %156 = arith.index_cast %155 : i32 to index
    %c0_155 = arith.constant 0 : index
    %157 = vector.load %arg5[%156, %c0_155] : memref<152x128xf32, #tpu.memory_space<vmem>>, vector<1x128xf32>
    %c10 = arith.constant 10 : index
    %c0_156 = arith.constant 0 : index
    %158 = vector.load %arg9[%c10, %c0_156] : memref<128x128xf32, #tpu.memory_space<vmem>>, vector<1x128xf32>
    tpu.vector_store %arg9[%c10, %c0_156], %157 {strides = array<i32>} : memref<128x128xf32, #tpu.memory_space<vmem>>, vector<1x128xf32>,
    %c1_157 = arith.constant 1 : index
    %c5_158 = arith.constant 5 : index
    %159 = memref.load %arg2[%c1_157, %c5_158] : memref<2x6xi32, #tpu.memory_space<smem>>
    %c96_i32_159 = arith.constant 96 : i32
    %160 = arith.addi %c96_i32_159, %159 : i32
    %161 = arith.index_cast %160 : i32 to index
    %c0_160 = arith.constant 0 : index
    %162 = vector.load %arg5[%161, %c0_160] : memref<152x128xf32, #tpu.memory_space<vmem>>, vector<1x128xf32>
    %c11 = arith.constant 11 : index
    %c0_161 = arith.constant 0 : index
    %163 = vector.load %arg9[%c11, %c0_161] : memref<128x128xf32, #tpu.memory_space<vmem>>, vector<1x128xf32>
    tpu.vector_store %arg9[%c11, %c0_161], %162 {strides = array<i32>} : memref<128x128xf32, #tpu.memory_space<vmem>>, vector<1x128xf32>,
    %c0_162 = arith.constant 0 : index
    %c0_163 = arith.constant 0 : index
    %164 = vector.load %arg7[%c0_162, %c0_163] : memref<2x264xf32, #tpu.memory_space<vmem>>, vector<2x264xf32>
    %165 = arith.truncf %164 : vector<2x264xf32> to vector<2x264xbf16>
    %c0_164 = arith.constant 0 : index
    %c0_165 = arith.constant 0 : index
    %166 = vector.load %arg4[%c0_164, %c0_165] : memref<264x288xbf16, #tpu.memory_space<vmem>>, vector<264x288xbf16>
    %cst_166 = arith.constant dense<0.000000e+00> : vector<2x288xf32>
    %167 = tpu.matmul %165, %166, %cst_166 {dimension_numbers = #tpu.dot_dimension_numbers<[1], [0], [0], [1], [0, 0, 1, 1], [], []>} : vector<2x264xbf16>, vector<264x288xbf16>, vector<2x288xf32> -> vector<2x288xf32>
    %168 = vector.extract_strided_slice %167 {offsets = [0, 0], sizes = [2, 256], strides = [1, 1]} : vector<2x288xf32> to vector<2x256xf32>
    %cst_167 = arith.constant 0.000000e+00 : f32
    %169 = vector.broadcast %cst_167 : f32 to vector<2x256xf32>
    %170 = arith.maximumf %168, %169 : vector<2x256xf32>
    %171 = vector.extract_strided_slice %170 {offsets = [0, 0], sizes = [2, 128], strides = [1, 1]} : vector<2x256xf32> to vector<2x128xf32>
    %172 = vector.extract_strided_slice %170 {offsets = [0, 128], sizes = [2, 128], strides = [1, 1]} : vector<2x256xf32> to vector<2x128xf32>
    %173 = arith.maximumf %171, %172 : vector<2x128xf32>
    %c64_i32_168 = arith.constant 64 : i32
    %174 = tpu.dynamic_rotate %173 by %c64_i32_168 dim 1 : vector<2x128xf32>, i32 -> vector<2x128xf32>
    %175 = arith.maximumf %173, %174 : vector<2x128xf32>
    %c32_i32_169 = arith.constant 32 : i32
    %176 = tpu.dynamic_rotate %175 by %c32_i32_169 dim 1 : vector<2x128xf32>, i32 -> vector<2x128xf32>
    %177 = arith.maximumf %175, %176 : vector<2x128xf32>
    %178 = vector.extract_strided_slice %177 {offsets = [0, 0], sizes = [2, 32], strides = [1, 1]} : vector<2x128xf32> to vector<2x32xf32>
    %179 = vector.extract_strided_slice %167 {offsets = [0, 256], sizes = [2, 32], strides = [1, 1]} : vector<2x288xf32> to vector<2x32xf32>
    %c0_170 = arith.constant 0 : index
    %c0_171 = arith.constant 0 : index
    %180 = vector.load %arg5[%c0_170, %c0_171] : memref<152x128xf32, #tpu.memory_space<vmem>>, vector<32x32xf32>
    %cst_172 = arith.constant dense<0.000000e+00> : vector<2x32xf32>
    %181 = tpu.matmul %178, %180, %cst_172 {dimension_numbers = #tpu.dot_dimension_numbers<[1], [0], [0], [1], [0, 0, 1, 1], [], []>} : vector<2x32xf32>, vector<32x32xf32>, vector<2x32xf32> -> vector<2x32xf32>
    %182 = arith.addf %179, %181 : vector<2x32xf32>
    %cst_173 = arith.constant 0.000000e+00 : f32
    %183 = vector.broadcast %cst_173 : f32 to vector<2x32xf32>
    %184 = arith.maximumf %182, %183 : vector<2x32xf32>
    %c0_174 = arith.constant 0 : index
    %c0_175 = arith.constant 0 : index
    %185 = vector.load %arg8[%c0_174, %c0_175] : memref<2x128xf32, #tpu.memory_space<vmem>>, vector<2x32xf32>
    tpu.vector_store %arg8[%c0_174, %c0_175], %184 {strides = array<i32>} : memref<2x128xf32, #tpu.memory_space<vmem>>, vector<2x32xf32>,
    %c0_176 = arith.constant 0 : index
    %c0_177 = arith.constant 0 : index
    %186 = vector.load %arg8[%c0_176, %c0_177] : memref<2x128xf32, #tpu.memory_space<vmem>>, vector<2x128xf32>
    %c0_178 = arith.constant 0 : index
    %c0_179 = arith.constant 0 : index
    %187 = vector.load %arg9[%c0_178, %c0_179] : memref<128x128xf32, #tpu.memory_space<vmem>>, vector<128x128xf32>
    %cst_180 = arith.constant dense<0.000000e+00> : vector<2x128xf32>
    %188 = tpu.matmul %186, %187, %cst_180 {dimension_numbers = #tpu.dot_dimension_numbers<[1], [1], [0], [0], [0, 0, 1, 0], [], []>} : vector<2x128xf32>, vector<128x128xf32>, vector<2x128xf32> -> vector<2x128xf32>
    %c0_181 = arith.constant 0 : index
    %c0_182 = arith.constant 0 : index
    %189 = vector.load %arg6[%c0_181, %c0_182] : memref<2x128xf32, #tpu.memory_space<vmem>>, vector<2x128xf32>
    tpu.vector_store %arg6[%c0_181, %c0_182], %188 {strides = array<i32>} : memref<2x128xf32, #tpu.memory_space<vmem>>, vector<2x128xf32>,
    return
  }
  func.func @transform_0(%arg0: i32, %arg1: memref<2x8xi32, #tpu.memory_space<smem>>, %arg2: memref<2x6xi32, #tpu.memory_space<smem>>, %arg3: memref<2xi32, #tpu.memory_space<smem>>) -> (i32, i32) {
    %c0_i32 = arith.constant 0 : i32
    %c0_i32_0 = arith.constant 0 : i32
    %c0_i32_1 = arith.constant 0 : i32
    return %c0_i32, %c0_i32_0 : i32, i32
  }
  func.func @transform_1(%arg0: i32, %arg1: memref<2x8xi32, #tpu.memory_space<smem>>, %arg2: memref<2x6xi32, #tpu.memory_space<smem>>, %arg3: memref<2xi32, #tpu.memory_space<smem>>) -> (i32, i32) {
    %c0_i32 = arith.constant 0 : i32
    %c0_i32_0 = arith.constant 0 : i32
    %c0_i32_1 = arith.constant 0 : i32
    return %c0_i32, %c0_i32_0 : i32, i32
  }
  func.func @transform_2(%arg0: i32, %arg1: memref<2x8xi32, #tpu.memory_space<smem>>, %arg2: memref<2x6xi32, #tpu.memory_space<smem>>, %arg3: memref<2xi32, #tpu.memory_space<smem>>) -> (i32, i32) {
    %c0_i32 = arith.constant 0 : i32
    %c0_i32_0 = arith.constant 0 : i32
    %c0_i32_1 = arith.constant 0 : i32
    return %c0_i32, %c0_i32_0 : i32, i32
  }
}

</mosaic_0001>

<llo_original>
// kernel: caser_forward.1
$region0: #{caser_forward.1}
  #allocation0 [shape = 'u32[]', space=smem, size = 0x4, offset = 0x4, fixed_abs, tag = 'smem constant byte address 0x4 - core index']
  #allocation1 [shape = 'u32[144,128]{1,0:T(1,128)}', space=vmem, size = 0x12000, scoped, tag = 'internal scratch']
  #allocation2 [shape = 'f32[2,264]{1,0:T(2,128)}', space=vmem, size = 0xc00, scoped, tag = 'scratch operand']
  #allocation3 [shape = 'f32[2,128]{1,0:T(2,128)}', space=vmem, size = 0x400, scoped, tag = 'scratch operand']
  #allocation4 [shape = 'f32[128,128]{1,0:T(8,128)}', space=vmem, size = 0x10000, scoped, tag = 'scratch operand']
  #allocation5 [shape = 's32[1]{0}', space=sflag, size = 0x4, scoped, tag = 'scoped memory for caser_forward.1']
  #allocation6 [shape = 'u8[1024]{0}', space=smem, size = 0x400, scoped, tag = 'prefetched SMEM operand 0']
  #allocation7 [shape = 'u8[1024]{0}', space=smem, size = 0x400, scoped, tag = 'prefetched SMEM operand 1']
  #allocation8 [shape = 'u8[512]{0}', space=smem, size = 0x200, scoped, tag = 'prefetched SMEM operand 2']
  %s0 = inlined_call_operand.vmem [shape: s32[2,8], index: 0, kind: input, shape index: {}]
  %s1 = inlined_call_operand.vmem [shape: s32[2,6], index: 1, kind: input, shape index: {}]
  %s2 = inlined_call_operand.vmem [shape: s32[2], index: 2, kind: input, shape index: {}]
  %s3 = inlined_call_operand.hbm [shape: bf16[264,288], index: 3, kind: input, shape index: {}]
  %s4 = inlined_call_operand.hbm [shape: f32[152,128], index: 4, kind: input, shape index: {}]
  %s5 = inlined_call_operand.vmem [shape: f32[2,128], index: 5, kind: output, shape index: {}]
  %s6 = sld [smem:[#allocation0]]
  $region26: #{caser_forward.1} parent=0
    _
  %s8 = ssub.s32 1, %s6
  %s9 = scalar_select 0, %s8, %s6
  %s10 = sshll.u32 %s0, 4
  %s11 = int_to_ptr.vmem [resolvable:$true] %s10
  %13 = dma.vmem_to_smem %s11, 32, [#allocation6], [#allocation5]
  %s14 = sshll.u32 %s1, 4
  %s15 = int_to_ptr.vmem [resolvable:$true] %s14
  %17 = dma.vmem_to_smem %s15, 32, [#allocation7], [#allocation5]
  %s18 = sshll.u32 %s2, 4
  %s19 = int_to_ptr.vmem [resolvable:$true] %s18
  %21 = dma.vmem_to_smem %s19, 16, [#allocation8], [#allocation5]
  %22 = dma.done [#allocation5], 80
  %23 = sfence
  $region1: #{caser_forward.1} parent=0
    #allocation9 [shape = 'u8[202752]{0}', space=vmem, size = 0x31800, scoped, tag = 'input window, operand 3, single buffered']
    #allocation10 [shape = 's32[1]{0}', space=sflag, size = 0x4, scoped, tag = 'scoped memory for caser_forward.1']
    #allocation11 [shape = 'u8[77824]{0}', space=vmem, size = 0x13000, scoped, tag = 'input window, operand 4, single buffered']
    #allocation12 [shape = 's32[1]{0}', space=sflag, size = 0x4, scoped, tag = 'scoped memory for caser_forward.1']
    %24 = vsyncpa [#allocation10], 0
    %25 = vsyncpa [#allocation12], 0
    // Predicated region
    $region2: #{caser_forward.1} parent=1 // pred_check
      _
    $region3: #{caser_forward.1} parent=1 // pred_check_branch
      %27 = sbr.rel (0) target = $region5
    $region4: #{caser_forward.1} parent=1 // pred_region
      %s29 = ssub.s32 6336, 6336
      %30 = vsyncadd [#allocation10], %s29
      %s31 = sshll.u32 [#allocation9], 4
      %s32 = int_to_ptr.vmem [resolvable:$true] %s31
      %37 = dma.hbm_to_vmem [thread:$0]  %s3, 6336, %s32, [#allocation10], 192, 192, 12
    $region5: #{caser_forward.1} parent=1 // pred_fallthru
      _
    // Predicated region
    $region6: #{caser_forward.1} parent=1 // pred_check
      _
    $region7: #{caser_forward.1} parent=1 // pred_check_branch
      %39 = sbr.rel (0) target = $region9
    $region8: #{caser_forward.1} parent=1 // pred_region
      %s41 = ssub.s32 2432, 2432
      %42 = vsyncadd [#allocation12], %s41
      %s43 = sshll.u32 [#allocation11], 4
      %s44 = int_to_ptr.vmem [resolvable:$true] %s43
      %49 = dma.hbm_to_vmem [thread:$0]  %s4, 2432, %s44, [#allocation12], 128, 128, 8
    $region9: #{caser_forward.1} parent=1 // pred_fallthru
      _
    // Predicated region
    $region10: #{caser_forward.1} parent=1 // pred_check
      _
    $region11: #{caser_forward.1} parent=1 // pred_check_branch
      %51 = sbr.rel (0) target = $region13
    $region12: #{caser_forward.1} parent=1 // pred_region
      %52 = dma.done [#allocation10], 6336
    $region13: #{caser_forward.1} parent=1 // pred_fallthru
      _
    // Predicated region
    $region14: #{caser_forward.1} parent=1 // pred_check
      _
    $region15: #{caser_forward.1} parent=1 // pred_check_branch
      %54 = sbr.rel (0) target = $region17
    $region16: #{caser_forward.1} parent=1 // pred_region
      %55 = dma.done [#allocation12], 2432
    $region17: #{caser_forward.1} parent=1 // pred_fallthru
      _
    %v57 = vlaneseq
    %v58 = vand.u32 %v57, 127
    %v59 = vadd.s32 %v58, 128
    %v60 = vadd.s32 %v58, 256
    %vm61 = vcmp.eq.s32.totalorder %v58, 256
    %vm62 = vcmp.eq.s32.totalorder %v59, 256
    %vm63 = vcmp.eq.s32.totalorder %v60, 256
    %v64 = vsel %vm61, 1, 0
    %v65 = vsel %vm62, 1, 0
    %v66 = vsel %vm63, 1, 0
    %v67 = vcvt.s32.f32 %v64
    %v68 = vcvt.s32.f32 %v65
    %v69 = vcvt.s32.f32 %v66
    %v73 = vcombine.low %v67, %v68
    %v75 = vunpack.c.l.s4 1983009808
    %v76 = vunpack.c.0.s8 %v75
    %v77 = vlaneseq
    %v78 = vshrl.u32 %v77, 7
    %v79 = vsub.s32 %v76, %v78
    %v80 = vrot.slane %v73, %v79
    %v82 = vunpack.c.l.s4 1983009808
    %v83 = vunpack.c.0.s8 %v82
    %v84 = vlaneseq
    %v85 = vshrl.u32 %v84, 7
    %v86 = vsub.s32 %v83, %v85
    %v87 = vrot.slane %v69, %v86
    %v88 = vcombine.low %v80, %v87
    %vm90 = vcmask 1041408
    %vm91 = vcmask 1043458
    %vm92 = vmor %vm91, %vm90
    %vm93 = vcmask 62468
    %vm94 = vmor %vm93, %vm92
    %95 = vst.msk [vmem:[#allocation2] sm:$0x3f] %vm94, %v88
    %vm96 = vcmp.eq.s32.totalorder %v58, 64
    %v97 = vsel %vm96, 1, 0
    %v98 = vcvt.s32.f32 %v97
    %99 = vst [vmem:[#allocation3] sm:$0x3] %v98
    %100 = vst [vmem:[#allocation4] sm:$0xff] 0.0
    %101 = vst [vmem:[#allocation4 + $0x8] sm:$0xff] 0.0
    %102 = vst [vmem:[#allocation4 + $0x10] sm:$0xff] 0.0
    %103 = vst [vmem:[#allocation4 + $0x18] sm:$0xff] 0.0
    %104 = vst [vmem:[#allocation4 + $0x20] sm:$0xff] 0.0
    %105 = vst [vmem:[#allocation4 + $0x28] sm:$0xff] 0.0
    %106 = vst [vmem:[#allocation4 + $0x30] sm:$0xff] 0.0
    %107 = vst [vmem:[#allocation4 + $0x38] sm:$0xff] 0.0
    %108 = vst [vmem:[#allocation4 + $0x40] sm:$0xff] 0.0
    %109 = vst [vmem:[#allocation4 + $0x48] sm:$0xff] 0.0
    %110 = vst [vmem:[#allocation4 + $0x50] sm:$0xff] 0.0
    %111 = vst [vmem:[#allocation4 + $0x58] sm:$0xff] 0.0
    %112 = vst [vmem:[#allocation4 + $0x60] sm:$0xff] 0.0
    %113 = vst [vmem:[#allocation4 + $0x68] sm:$0xff] 0.0
    %114 = vst [vmem:[#allocation4 + $0x70] sm:$0xff] 0.0
    %115 = vst [vmem:[#allocation4 + $0x78] sm:$0xff] 0.0
    %s116 = sld [smem:[#allocation6]]
    %s117 = sadd.s32 %s116, 32
    %s118 = scalar_lea.vmem [#allocation11], %s117
    %v119 = vld [vmem:[%s118] sm:$0x1]
    %vm120 = vcmask 253952
    %121 = vst.msk [vmem:[#allocation2] sm:$0x1] %vm120, %v119
    %s122 = sld [smem:[#allocation6 + $0x1]]
    %s123 = sadd.s32 %s122, 32
    %s124 = scalar_lea.vmem [#allocation11], %s123
    %v125 = vld [vmem:[%s124] sm:$0x1]
    %v128 = vunpack.c.l.s4 1983009808
    %v129 = vunpack.c.0.s8 %v128
    %v130 = vlaneseq
    %v131 = vshrl.u32 %v130, 7
    %v132 = vsub.s32 %v129, %v131
    %v133 = vrot.slane %v125, %v132
    %134 = vrot.lane.b32.xlu0 %v133, 32
    %v135 = vpop.permute.xlu0 %134
    %vm137 = vcmask 516352
    %138 = vst.msk [vmem:[#allocation2] sm:$0x1] %vm137, %v135
    %s139 = sld [smem:[#allocation6 + $0x2]]
    %s140 = sadd.s32 %s139, 32
    %s141 = scalar_lea.vmem [#allocation11], %s140
    %v142 = vld [vmem:[%s141] sm:$0x1]
    %v145 = vunpack.c.l.s4 1983009808
    %v146 = vunpack.c.0.s8 %v145
    %v147 = vlaneseq
    %v148 = vshrl.u32 %v147, 7
    %v149 = vsub.s32 %v146, %v148
    %v150 = vrot.slane %v142, %v149
    %151 = vrot.lane.b32.xlu0 %v150, 64
    %v152 = vpop.permute.xlu0 %151
    %vm154 = vcmask 778752
    %155 = vst.msk [vmem:[#allocation2] sm:$0x1] %vm154, %v152
    %s156 = sld [smem:[#allocation6 + $0x3]]
    %s157 = sadd.s32 %s156, 32
    %s158 = scalar_lea.vmem [#allocation11], %s157
    %v159 = vld [vmem:[%s158] sm:$0x1]
    %v162 = vunpack.c.l.s4 1983009808
    %v163 = vunpack.c.0.s8 %v162
    %v164 = vlaneseq
    %v165 = vshrl.u32 %v164, 7
    %v166 = vsub.s32 %v163, %v165
    %v167 = vrot.slane %v159, %v166
    %168 = vrot.lane.b32.xlu0 %v167, 96
    %v169 = vpop.permute.xlu0 %168
    %vm171 = vcmask 1041152
    %172 = vst.msk [vmem:[#allocation2] sm:$0x1] %vm171, %v169
    %s173 = sld [smem:[#allocation6 + $0x4]]
    %s174 = sadd.s32 %s173, 32
    %s175 = scalar_lea.vmem [#allocation11], %s174
    %v176 = vld [vmem:[%s175] sm:$0x1]
    %177 = vst.msk [vmem:[#allocation2 + $0x2] sm:$0x1] %vm120, %v176
    %s178 = sld [smem:[#allocation6 + $0x5]]
    %s179 = sadd.s32 %s178, 32
    %s180 = scalar_lea.vmem [#allocation11], %s179
    %v181 = vld [vmem:[%s180] sm:$0x1]
    %v184 = vunpack.c.l.s4 1983009808
    %v185 = vunpack.c.0.s8 %v184
    %v186 = vlaneseq
    %v187 = vshrl.u32 %v186, 7
    %v188 = vsub.s32 %v185, %v187
    %v189 = vrot.slane %v181, %v188
    %190 = vrot.lane.b32.xlu0 %v189, 32
    %v191 = vpop.permute.xlu0 %190
    %193 = vst.msk [vmem:[#allocation2 + $0x2] sm:$0x1] %vm137, %v191
    %s194 = sld [smem:[#allocation6 + $0x6]]
    %s195 = sadd.s32 %s194, 32
    %s196 = scalar_lea.vmem [#allocation11], %s195
    %v197 = vld [vmem:[%s196] sm:$0x1]
    %v200 = vunpack.c.l.s4 1983009808
    %v201 = vunpack.c.0.s8 %v200
    %v202 = vlaneseq
    %v203 = vshrl.u32 %v202, 7
    %v204 = vsub.s32 %v201, %v203
    %v205 = vrot.slane %v197, %v204
    %206 = vrot.lane.b32.xlu0 %v205, 64
    %v207 = vpop.permute.xlu0 %206
    %209 = vst.msk [vmem:[#allocation2 + $0x2] sm:$0x1] %vm154, %v207
    %s210 = sld [smem:[#allocation6 + $0x7]]
    %s211 = sadd.s32 %s210, 32
    %s212 = scalar_lea.vmem [#allocation11], %s211
    %v213 = vld [vmem:[%s212] sm:$0x1]
    %v216 = vunpack.c.l.s4 1983009808
    %v217 = vunpack.c.0.s8 %v216
    %v218 = vlaneseq
    %v219 = vshrl.u32 %v218, 7
    %v220 = vsub.s32 %v217, %v219
    %v221 = vrot.slane %v213, %v220
    %222 = vrot.lane.b32.xlu0 %v221, 96
    %v223 = vpop.permute.xlu0 %222
    %225 = vst.msk [vmem:[#allocation2 + $0x2] sm:$0x1] %vm171, %v223
    %s226 = sld [smem:[#allocation8]]
    %s227 = sadd.s32 %s226, 83
    %s228 = scalar_lea.vmem [#allocation11], %s227
    %v229 = vld [vmem:[%s228] sm:$0x1]
    %231 = vrot.lane.b32.xlu0 %v229, 32
    %v232 = vpop.permute.xlu0 %231
    %234 = vst.msk [vmem:[#allocation3] sm:$0x1] %vm137, %v232
    %s235 = sld [smem:[#allocation6 + $0x80]]
    %s236 = sadd.s32 %s235, 32
    %s237 = scalar_lea.vmem [#allocation11], %s236
    %v238 = vld [vmem:[%s237] sm:$0x1]
    %239 = vst.msk [vmem:[#allocation2 + $0x1] sm:$0x1] %vm120, %v238
    %s240 = sld [smem:[#allocation6 + $0x81]]
    %s241 = sadd.s32 %s240, 32
    %s242 = scalar_lea.vmem [#allocation11], %s241
    %v243 = vld [vmem:[%s242] sm:$0x1]
    %v246 = vunpack.c.l.s4 1983009808
    %v247 = vunpack.c.0.s8 %v246
    %v248 = vlaneseq
    %v249 = vshrl.u32 %v248, 7
    %v250 = vsub.s32 %v247, %v249
    %v251 = vrot.slane %v243, %v250
    %252 = vrot.lane.b32.xlu0 %v251, 32
    %v253 = vpop.permute.xlu0 %252
    %255 = vst.msk [vmem:[#allocation2 + $0x1] sm:$0x1] %vm137, %v253
    %s256 = sld [smem:[#allocation6 + $0x82]]
    %s257 = sadd.s32 %s256, 32
    %s258 = scalar_lea.vmem [#allocation11], %s257
    %v259 = vld [vmem:[%s258] sm:$0x1]
    %v262 = vunpack.c.l.s4 1983009808
    %v263 = vunpack.c.0.s8 %v262
    %v264 = vlaneseq
    %v265 = vshrl.u32 %v264, 7
    %v266 = vsub.s32 %v263, %v265
    %v267 = vrot.slane %v259, %v266
    %268 = vrot.lane.b32.xlu0 %v267, 64
    %v269 = vpop.permute.xlu0 %268
    %271 = vst.msk [vmem:[#allocation2 + $0x1] sm:$0x1] %vm154, %v269
    %s272 = sld [smem:[#allocation6 + $0x83]]
    %s273 = sadd.s32 %s272, 32
    %s274 = scalar_lea.vmem [#allocation11], %s273
    %v275 = vld [vmem:[%s274] sm:$0x1]
    %v278 = vunpack.c.l.s4 1983009808
    %v279 = vunpack.c.0.s8 %v278
    %v280 = vlaneseq
    %v281 = vshrl.u32 %v280, 7
    %v282 = vsub.s32 %v279, %v281
    %v283 = vrot.slane %v275, %v282
    %284 = vrot.lane.b32.xlu0 %v283, 96
    %v285 = vpop.permute.xlu0 %284
    %287 = vst.msk [vmem:[#allocation2 + $0x1] sm:$0x1] %vm171, %v285
    %s288 = sld [smem:[#allocation6 + $0x84]]
    %s289 = sadd.s32 %s288, 32
    %s290 = scalar_lea.vmem [#allocation11], %s289
    %v291 = vld [vmem:[%s290] sm:$0x1]
    %292 = vst.msk [vmem:[#allocation2 + $0x3] sm:$0x1] %vm120, %v291
    %s293 = sld [smem:[#allocation6 + $0x85]]
    %s294 = sadd.s32 %s293, 32
    %s295 = scalar_lea.vmem [#allocation11], %s294
    %v296 = vld [vmem:[%s295] sm:$0x1]
    %v299 = vunpack.c.l.s4 1983009808
    %v300 = vunpack.c.0.s8 %v299
    %v301 = vlaneseq
    %v302 = vshrl.u32 %v301, 7
    %v303 = vsub.s32 %v300, %v302
    %v304 = vrot.slane %v296, %v303
    %305 = vrot.lane.b32.xlu0 %v304, 32
    %v306 = vpop.permute.xlu0 %305
    %308 = vst.msk [vmem:[#allocation2 + $0x3] sm:$0x1] %vm137, %v306
    %s309 = sld [smem:[#allocation6 + $0x86]]
    %s310 = sadd.s32 %s309, 32
    %s311 = scalar_lea.vmem [#allocation11], %s310
    %v312 = vld [vmem:[%s311] sm:$0x1]
    %v315 = vunpack.c.l.s4 1983009808
    %v316 = vunpack.c.0.s8 %v315
    %v317 = vlaneseq
    %v318 = vshrl.u32 %v317, 7
    %v319 = vsub.s32 %v316, %v318
    %v320 = vrot.slane %v312, %v319
    %321 = vrot.lane.b32.xlu0 %v320, 64
    %v322 = vpop.permute.xlu0 %321
    %324 = vst.msk [vmem:[#allocation2 + $0x3] sm:$0x1] %vm154, %v322
    %s325 = sld [smem:[#allocation6 + $0x87]]
    %s326 = sadd.s32 %s325, 32
    %s327 = scalar_lea.vmem [#allocation11], %s326
    %v328 = vld [vmem:[%s327] sm:$0x1]
    %v331 = vunpack.c.l.s4 1983009808
    %v332 = vunpack.c.0.s8 %v331
    %v333 = vlaneseq
    %v334 = vshrl.u32 %v333, 7
    %v335 = vsub.s32 %v332, %v334
    %v336 = vrot.slane %v328, %v335
    %337 = vrot.lane.b32.xlu0 %v336, 96
    %v338 = vpop.permute.xlu0 %337
    %340 = vst.msk [vmem:[#allocation2 + $0x3] sm:$0x1] %vm171, %v338
    %s341 = sld [smem:[#allocation8 + $0x1]]
    %s342 = sadd.s32 %s341, 83
    %s343 = scalar_lea.vmem [#allocation11], %s342
    %v344 = vld [vmem:[%s343] sm:$0x1]
    %346 = vrot.lane.b32.xlu0 %v344, 32
    %v347 = vpop.permute.xlu0 %346
    %349 = vst.msk [vmem:[#allocation3 + $0x1] sm:$0x1] %vm137, %v347
    %s350 = sld [smem:[#allocation7]]
    %s351 = sadd.s32 %s350, 96
    %s352 = scalar_lea.vmem [#allocation11], %s351
    %v353 = vld [vmem:[%s352] sm:$0x1]
    %354 = vst [vmem:[#allocation4] sm:$0x1] %v353
    %s355 = sld [smem:[#allocation7 + $0x1]]
    %s356 = sadd.s32 %s355, 96
    %s357 = scalar_lea.vmem [#allocation11], %s356
    %v358 = vld [vmem:[%s357] sm:$0x1]
    %359 = vst [vmem:[#allocation4 + $0x1] sm:$0x1] %v358
    %s360 = sld [smem:[#allocation7 + $0x2]]
    %s361 = sadd.s32 %s360, 96
    %s362 = scalar_lea.vmem [#allocation11], %s361
    %v363 = vld [vmem:[%s362] sm:$0x1]
    %364 = vst [vmem:[#allocation4 + $0x2] sm:$0x1] %v363
    %s365 = sld [smem:[#allocation7 + $0x3]]
    %s366 = sadd.s32 %s365, 96
    %s367 = scalar_lea.vmem [#allocation11], %s366
    %v368 = vld [vmem:[%s367] sm:$0x1]
    %369 = vst [vmem:[#allocation4 + $0x3] sm:$0x1] %v368
    %s370 = sld [smem:[#allocation7 + $0x4]]
    %s371 = sadd.s32 %s370, 96
    %s372 = scalar_lea.vmem [#allocation11], %s371
    %v373 = vld [vmem:[%s372] sm:$0x1]
    %374 = vst [vmem:[#allocation4 + $0x4] sm:$0x1] %v373
    %s375 = sld [smem:[#allocation7 + $0x5]]
    %s376 = sadd.s32 %s375, 96
    %s377 = scalar_lea.vmem [#allocation11], %s376
    %v378 = vld [vmem:[%s377] sm:$0x1]
    %379 = vst [vmem:[#allocation4 + $0x5] sm:$0x1] %v378
    %s380 = sld [smem:[#allocation7 + $0x80]]
    %s381 = sadd.s32 %s380, 96
    %s382 = scalar_lea.vmem [#allocation11], %s381
    %v383 = vld [vmem:[%s382] sm:$0x1]
    %384 = vst [vmem:[#allocation4 + $0x6] sm:$0x1] %v383
    %s385 = sld [smem:[#allocation7 + $0x81]]
    %s386 = sadd.s32 %s385, 96
    %s387 = scalar_lea.vmem [#allocation11], %s386
    %v388 = vld [vmem:[%s387] sm:$0x1]
    %389 = vst [vmem:[#allocation4 + $0x7] sm:$0x1] %v388
    %s390 = sld [smem:[#allocation7 + $0x82]]
    %s391 = sadd.s32 %s390, 96
    %s392 = scalar_lea.vmem [#allocation11], %s391
    %v393 = vld [vmem:[%s392] sm:$0x1]
    %394 = vst [vmem:[#allocation4 + $0x8] sm:$0x1] %v393
    %s395 = sld [smem:[#allocation7 + $0x83]]
    %s396 = sadd.s32 %s395, 96
    %s397 = scalar_lea.vmem [#allocation11], %s396
    %v398 = vld [vmem:[%s397] sm:$0x1]
    %399 = vst [vmem:[#allocation4 + $0x9] sm:$0x1] %v398
    %s400 = sld [smem:[#allocation7 + $0x84]]
    %s401 = sadd.s32 %s400, 96
    %s402 = scalar_lea.vmem [#allocation11], %s401
    %v403 = vld [vmem:[%s402] sm:$0x1]
    %404 = vst [vmem:[#allocation4 + $0xa] sm:$0x1] %v403
    %s405 = sld [smem:[#allocation7 + $0x85]]
    %s406 = sadd.s32 %s405, 96
    %s407 = scalar_lea.vmem [#allocation11], %s406
    %v408 = vld [vmem:[%s407] sm:$0x1]
    %409 = vst [vmem:[#allocation4 + $0xb] sm:$0x1] %v408
    %v410 = vld [vmem:[#allocation2] sm:$0x3f]
    %v412 = vcombine.high %v410, %v410
    %v414 = vunpack.c.l.s4 1983009808
    %v415 = vunpack.c.0.s8 %v414
    %v416 = vlaneseq
    %v417 = vshrl.u32 %v416, 7
    %v418 = vsub.s32 %v415, %v417
    %v419 = vrot.slane %v410, %v418
    %v421 = vunpack.c.l.s4 1983009808
    %v422 = vunpack.c.0.s8 %v421
    %v423 = vlaneseq
    %v424 = vshrl.u32 %v423, 7
    %v425 = vsub.s32 %v422, %v424
    %v426 = vrot.slane %v412, %v425
    %v427 = vcombine.high %v419, %v419
    %v431 = vpack.c.bf16 %v419, %v419
    %v432 = vpack.c.bf16 %v427, %v427
    %v433 = vpack.c.bf16 %v426, %v426
    %v434 = vld [vmem:[#allocation9] sm:$0xff]
    %v435 = vld [vmem:[#allocation9 + $0x8] sm:$0xf]
    %v436 = vld [vmem:[#allocation9 + $0xc] sm:$0xff]
    %v437 = vld [vmem:[#allocation9 + $0x14] sm:$0xf]
    %v438 = vld [vmem:[#allocation9 + $0x18] sm:$0xff]
    %v439 = vld [vmem:[#allocation9 + $0x20] sm:$0xf]
    %v440 = vld [vmem:[#allocation9 + $0x24] sm:$0xff]
    %v441 = vld [vmem:[#allocation9 + $0x2c] sm:$0xf]
    %v442 = vld [vmem:[#allocation9 + $0x30] sm:$0xff]
    %v443 = vld [vmem:[#allocation9 + $0x38] sm:$0xf]
    %v444 = vld [vmem:[#allocation9 + $0x3c] sm:$0xff]
    %v445 = vld [vmem:[#allocation9 + $0x44] sm:$0xf]
    %v446 = vld [vmem:[#allocation9 + $0x48] sm:$0xff]
    %v447 = vld [vmem:[#allocation9 + $0x50] sm:$0xf]
    %v448 = vld [vmem:[#allocation9 + $0x54] sm:$0xff]
    %v449 = vld [vmem:[#allocation9 + $0x5c] sm:$0xf]
    %v450 = vld [vmem:[#allocation9 + $0x60] sm:$0xff]
    %v451 = vld [vmem:[#allocation9 + $0x68] sm:$0xf]
    %v452 = vld [vmem:[#allocation9 + $0x6c] sm:$0xff]
    %v453 = vld [vmem:[#allocation9 + $0x74] sm:$0xf]
    %v454 = vld [vmem:[#allocation9 + $0x78] sm:$0xff]
    %v455 = vld [vmem:[#allocation9 + $0x80] sm:$0xf]
    %v456 = vld [vmem:[#allocation9 + $0x84] sm:$0xff]
    %v457 = vld [vmem:[#allocation9 + $0x8c] sm:$0xf]
    %v458 = vld [vmem:[#allocation9 + $0x90] sm:$0xff]
    %v459 = vld [vmem:[#allocation9 + $0x98] sm:$0xf]
    %v460 = vld [vmem:[#allocation9 + $0x9c] sm:$0xff]
    %v461 = vld [vmem:[#allocation9 + $0xa4] sm:$0xf]
    %v462 = vld [vmem:[#allocation9 + $0xa8] sm:$0xff]
    %v463 = vld [vmem:[#allocation9 + $0xb0] sm:$0xf]
    %v464 = vld [vmem:[#allocation9 + $0xb4] sm:$0xff]
    %v465 = vld [vmem:[#allocation9 + $0xbc] sm:$0xf]
    %v466 = vld [vmem:[#allocation9 + $0xc0] sm:$0xff]
    %v467 = vld [vmem:[#allocation9 + $0xc8] sm:$0xf]
    %v468 = vld [vmem:[#allocation9 + $0xcc] sm:$0xff]
    %v469 = vld [vmem:[#allocation9 + $0xd4] sm:$0xf]
    %v470 = vld [vmem:[#allocation9 + $0xd8] sm:$0xff]
    %v471 = vld [vmem:[#allocation9 + $0xe0] sm:$0xf]
    %v472 = vld [vmem:[#allocation9 + $0xe4] sm:$0xff]
    %v473 = vld [vmem:[#allocation9 + $0xec] sm:$0xf]
    %v474 = vld [vmem:[#allocation9 + $0xf0] sm:$0xff]
    %v475 = vld [vmem:[#allocation9 + $0xf8] sm:$0xf]
    %v476 = vld [vmem:[#allocation9 + $0xfc] sm:$0xff]
    %v477 = vld [vmem:[#allocation9 + $0x104] sm:$0xf]
    %v478 = vld [vmem:[#allocation9 + $0x108] sm:$0xff]
    %v479 = vld [vmem:[#allocation9 + $0x110] sm:$0xf]
    %v480 = vld [vmem:[#allocation9 + $0x114] sm:$0xff]
    %v481 = vld [vmem:[#allocation9 + $0x11c] sm:$0xf]
    %v482 = vld [vmem:[#allocation9 + $0x120] sm:$0xff]
    %v483 = vld [vmem:[#allocation9 + $0x128] sm:$0xf]
    %v484 = vld [vmem:[#allocation9 + $0x12c] sm:$0xff]
    %v485 = vld [vmem:[#allocation9 + $0x134] sm:$0xf]
    %v486 = vld [vmem:[#allocation9 + $0x138] sm:$0xff]
    %v487 = vld [vmem:[#allocation9 + $0x140] sm:$0xf]
    %v488 = vld [vmem:[#allocation9 + $0x144] sm:$0xff]
    %v489 = vld [vmem:[#allocation9 + $0x14c] sm:$0xf]
    %v490 = vld [vmem:[#allocation9 + $0x150] sm:$0xff]
    %v491 = vld [vmem:[#allocation9 + $0x158] sm:$0xf]
    %v492 = vld [vmem:[#allocation9 + $0x15c] sm:$0xff]
    %v493 = vld [vmem:[#allocation9 + $0x164] sm:$0xf]
    %v494 = vld [vmem:[#allocation9 + $0x168] sm:$0xff]
    %v495 = vld [vmem:[#allocation9 + $0x170] sm:$0xf]
    %v496 = vld [vmem:[#allocation9 + $0x174] sm:$0xff]
    %v497 = vld [vmem:[#allocation9 + $0x17c] sm:$0xf]
    %v498 = vld [vmem:[#allocation9 + $0x180] sm:$0xff]
    %v499 = vld [vmem:[#allocation9 + $0x188] sm:$0xf]
    %v566 = vunpack.c.l.b16 %v434
    %v567 = vunpack.c.h.b16 %v434
    %v568 = vunpack.c.l.b16 %v435
    %v569 = vunpack.c.l.b16 %v436
    %v570 = vunpack.c.h.b16 %v436
    %v571 = vunpack.c.l.b16 %v437
    %v572 = vunpack.c.l.b16 %v438
    %v573 = vunpack.c.h.b16 %v438
    %v574 = vunpack.c.l.b16 %v439
    %v575 = vunpack.c.l.b16 %v440
    %v576 = vunpack.c.h.b16 %v440
    %v577 = vunpack.c.l.b16 %v441
    %v578 = vunpack.c.l.b16 %v442
    %v579 = vunpack.c.h.b16 %v442
    %v580 = vunpack.c.l.b16 %v443
    %v581 = vunpack.c.l.b16 %v444
    %v582 = vunpack.c.h.b16 %v444
    %v583 = vunpack.c.l.b16 %v445
    %v584 = vunpack.c.l.b16 %v446
    %v585 = vunpack.c.h.b16 %v446
    %v586 = vunpack.c.l.b16 %v447
    %v587 = vunpack.c.l.b16 %v448
    %v588 = vunpack.c.h.b16 %v448
    %v589 = vunpack.c.l.b16 %v449
    %v590 = vunpack.c.l.b16 %v450
    %v591 = vunpack.c.h.b16 %v450
    %v592 = vunpack.c.l.b16 %v451
    %v593 = vunpack.c.l.b16 %v452
    %v594 = vunpack.c.h.b16 %v452
    %v595 = vunpack.c.l.b16 %v453
    %v596 = vunpack.c.l.b16 %v454
    %v597 = vunpack.c.h.b16 %v454
    %v598 = vunpack.c.l.b16 %v455
    %v599 = vunpack.c.l.b16 %v456
    %v600 = vunpack.c.h.b16 %v456
    %v601 = vunpack.c.l.b16 %v457
    %v602 = vunpack.c.l.b16 %v458
    %v603 = vunpack.c.h.b16 %v458
    %v604 = vunpack.c.l.b16 %v459
    %v605 = vunpack.c.l.b16 %v460
    %v606 = vunpack.c.h.b16 %v460
    %v607 = vunpack.c.l.b16 %v461
    %v608 = vunpack.c.l.b16 %v462
    %v609 = vunpack.c.h.b16 %v462
    %v610 = vunpack.c.l.b16 %v463
    %v611 = vunpack.c.l.b16 %v464
    %v612 = vunpack.c.h.b16 %v464
    %v613 = vunpack.c.l.b16 %v465
    %v614 = vunpack.c.l.b16 %v466
    %v615 = vunpack.c.h.b16 %v466
    %v616 = vunpack.c.l.b16 %v467
    %v617 = vunpack.c.l.b16 %v468
    %v618 = vunpack.c.h.b16 %v468
    %v619 = vunpack.c.l.b16 %v469
    %v620 = vunpack.c.l.b16 %v470
    %v621 = vunpack.c.h.b16 %v470
    %v622 = vunpack.c.l.b16 %v471
    %v623 = vunpack.c.l.b16 %v472
    %v624 = vunpack.c.h.b16 %v472
    %v625 = vunpack.c.l.b16 %v473
    %v626 = vunpack.c.l.b16 %v474
    %v627 = vunpack.c.h.b16 %v474
    %v628 = vunpack.c.l.b16 %v475
    %v629 = vunpack.c.l.b16 %v476
    %v630 = vunpack.c.h.b16 %v476
    %v631 = vunpack.c.l.b16 %v477
    %v632 = vunpack.c.l.b16 %v478
    %v633 = vunpack.c.h.b16 %v478
    %v634 = vunpack.c.l.b16 %v479
    %v635 = vunpack.c.l.b16 %v480
    %v636 = vunpack.c.h.b16 %v480
    %v637 = vunpack.c.l.b16 %v481
    %v638 = vunpack.c.l.b16 %v482
    %v639 = vunpack.c.h.b16 %v482
    %v640 = vunpack.c.l.b16 %v483
    %v641 = vunpack.c.l.b16 %v484
    %v642 = vunpack.c.h.b16 %v484
    %v643 = vunpack.c.l.b16 %v485
    %v644 = vunpack.c.l.b16 %v486
    %v645 = vunpack.c.h.b16 %v486
    %v646 = vunpack.c.l.b16 %v487
    %v647 = vunpack.c.l.b16 %v488
    %v648 = vunpack.c.h.b16 %v488
    %v649 = vunpack.c.l.b16 %v489
    %v650 = vunpack.c.l.b16 %v490
    %v651 = vunpack.c.h.b16 %v490
    %v652 = vunpack.c.l.b16 %v491
    %v653 = vunpack.c.l.b16 %v492
    %v654 = vunpack.c.h.b16 %v492
    %v655 = vunpack.c.l.b16 %v493
    %v656 = vunpack.c.l.b16 %v494
    %v657 = vunpack.c.h.b16 %v494
    %v658 = vunpack.c.l.b16 %v495
    %v659 = vunpack.c.l.b16 %v496
    %v660 = vunpack.c.h.b16 %v496
    %v661 = vunpack.c.l.b16 %v497
    %v662 = vunpack.c.l.b16 %v498
    %v663 = vunpack.c.h.b16 %v498
    %v664 = vunpack.c.l.b16 %v499
    %v665 = vpack.c.b16 %v569, %v566
    %v666 = vpack.c.b16 %v570, %v567
    %v667 = vpack.c.b16 %v571, %v568
    %v668 = vpack.c.b16 %v575, %v572
    %v669 = vpack.c.b16 %v576, %v573
    %v670 = vpack.c.b16 %v577, %v574
    %v671 = vpack.c.b16 %v581, %v578
    %v672 = vpack.c.b16 %v582, %v579
    %v673 = vpack.c.b16 %v583, %v580
    %v674 = vpack.c.b16 %v587, %v584
    %v675 = vpack.c.b16 %v588, %v585
    %v676 = vpack.c.b16 %v589, %v586
    %v677 = vpack.c.b16 %v593, %v590
    %v678 = vpack.c.b16 %v594, %v591
    %v679 = vpack.c.b16 %v595, %v592
    %v680 = vpack.c.b16 %v599, %v596
    %v681 = vpack.c.b16 %v600, %v597
    %v682 = vpack.c.b16 %v601, %v598
    %v683 = vpack.c.b16 %v605, %v602
    %v684 = vpack.c.b16 %v606, %v603
    %v685 = vpack.c.b16 %v607, %v604
    %v686 = vpack.c.b16 %v611, %v608
    %v687 = vpack.c.b16 %v612, %v609
    %v688 = vpack.c.b16 %v613, %v610
    %v689 = vpack.c.b16 %v617, %v614
    %v690 = vpack.c.b16 %v618, %v615
    %v691 = vpack.c.b16 %v619, %v616
    %v692 = vpack.c.b16 %v623, %v620
    %v693 = vpack.c.b16 %v624, %v621
    %v694 = vpack.c.b16 %v625, %v622
    %v695 = vpack.c.b16 %v629, %v626
    %v696 = vpack.c.b16 %v630, %v627
    %v697 = vpack.c.b16 %v631, %v628
    %v698 = vpack.c.b16 %v635, %v632
    %v699 = vpack.c.b16 %v636, %v633
    %v700 = vpack.c.b16 %v637, %v634
    %v701 = vpack.c.b16 %v641, %v638
    %v702 = vpack.c.b16 %v642, %v639
    %v703 = vpack.c.b16 %v643, %v640
    %v704 = vpack.c.b16 %v647, %v644
    %v705 = vpack.c.b16 %v648, %v645
    %v706 = vpack.c.b16 %v649, %v646
    %v707 = vpack.c.b16 %v653, %v650
    %v708 = vpack.c.b16 %v654, %v651
    %v709 = vpack.c.b16 %v655, %v652
    %v710 = vpack.c.b16 %v659, %v656
    %v711 = vpack.c.b16 %v660, %v657
    %v712 = vpack.c.b16 %v661, %v658
    %v713 = vpack.c.b16 %v662, %v662
    %v714 = vpack.c.b16 %v663, %v663
    %v715 = vpack.c.b16 %v664, %v664
    %vm764 = vcmask 64512
    %v766 = vsel %vm764, %v433, 0
    %vm768 = vcmask 1043456
    %v770 = vsel %vm768, %v713, 0
    %v773 = vsel %vm768, %v714, 0
    %v776 = vsel %vm768, %v715, 0
    %778 = vmatprep.subr.bf16.mxu0 %v666
    %779 = vmatpush1.bf16.msra.mxu0 %v665
    %780 = vmatprep.subr.bf16.mxu0 %v669
    %781 = vmatpush1.bf16.msra.mxu0 %v668
    %782 = vmatprep.subr.bf16.mxu0 %v672
    %783 = vmatpush1.bf16.msra.mxu0 %v671
    %784 = vmatprep.subr.bf16.mxu0 %v675
    %785 = vmatpush1.bf16.msra.mxu0 %v674
    %786 = vmatprep.subr.bf16.mxu0 %v678
    %787 = vmatpush1.bf16.msra.mxu0 %v677
    %788 = vmatprep.subr.bf16.mxu0 %v681
    %789 = vmatpush1.bf16.msra.mxu0 %v680
    %790 = vmatprep.subr.bf16.mxu0 %v684
    %791 = vmatpush1.bf16.msra.mxu0 %v683
    %792 = vmatprep.subr.bf16.mxu0 %v687
    %793 = vmatpush1.bf16.msra.mxu0 %v686
    %794 = vmatprep.subr.bf16.mxu0 %v690
    %795 = vmatpush1.bf16.msra.mxu0 %v689
    %796 = vmatprep.subr.bf16.mxu0 %v693
    %797 = vmatpush1.bf16.msra.mxu0 %v692
    %798 = vmatprep.subr.bf16.mxu0 %v696
    %799 = vmatpush1.bf16.msra.mxu0 %v695
    %800 = vmatprep.subr.bf16.mxu0 %v699
    %801 = vmatpush1.bf16.msra.mxu0 %v698
    %802 = vmatprep.subr.bf16.mxu0 %v702
    %803 = vmatpush1.bf16.msra.mxu0 %v701
    %804 = vmatprep.subr.bf16.mxu0 %v705
    %805 = vmatpush1.bf16.msra.mxu0 %v704
    %806 = vmatprep.subr.bf16.mxu0 %v708
    %807 = vmatpush1.bf16.msra.mxu0 %v707
    %808 = vmatprep.subr.bf16.mxu0 %v711
    %809 = vmatpush1.bf16.msra.mxu0 %v710
    %810 = vmatprep.mubr.bf16.mxu0 %v432
    %811 = vmatmul.mubr.bf16.gmra.mrb[0].mxu0 %v431
    %v812 = vpop.f32.mrb[0].mxu0
    %v813 = vadd.f32 0.0, %v812
    %v814 = vpop.f32.mrb[0].mxu0
    %v815 = vadd.f32 0.0, %v814
    %v816 = vpop.f32.mrb[0].mxu0
    %v817 = vpop.f32.mrb[0].mxu0
    %818 = vdwg.mxu0
    %819 = vmatprep.subr.bf16.mxu0 %v773
    %820 = vmatpush1.bf16.msra.mxu0 %v770
    %821 = vmatprep.subr.bf16.mxu0 0
    %822 = vmatpush1.bf16.msra.mxu0 0
    %823 = vmatprep.subr.bf16.mxu0 0
    %824 = vmatpush1.bf16.msra.mxu0 0
    %825 = vmatprep.subr.bf16.mxu0 0
    %826 = vmatpush1.bf16.msra.mxu0 0
    %827 = vmatprep.subr.bf16.mxu0 0
    %828 = vmatpush1.bf16.msra.mxu0 0
    %829 = vmatprep.subr.bf16.mxu0 0
    %830 = vmatpush1.bf16.msra.mxu0 0
    %831 = vmatprep.subr.bf16.mxu0 0
    %832 = vmatpush1.bf16.msra.mxu0 0
    %833 = vmatprep.subr.bf16.mxu0 0
    %834 = vmatpush1.bf16.msra.mxu0 0
    %835 = vmatprep.subr.bf16.mxu0 0
    %836 = vmatpush1.bf16.msra.mxu0 0
    %837 = vmatprep.subr.bf16.mxu0 0
    %838 = vmatpush1.bf16.msra.mxu0 0
    %839 = vmatprep.subr.bf16.mxu0 0
    %840 = vmatpush1.bf16.msra.mxu0 0
    %841 = vmatprep.subr.bf16.mxu0 0
    %842 = vmatpush1.bf16.msra.mxu0 0
    %843 = vmatprep.subr.bf16.mxu0 0
    %844 = vmatpush1.bf16.msra.mxu0 0
    %845 = vmatprep.subr.bf16.mxu0 0
    %846 = vmatpush1.bf16.msra.mxu0 0
    %847 = vmatprep.subr.bf16.mxu0 0
    %848 = vmatpush1.bf16.msra.mxu0 0
    %849 = vmatprep.subr.bf16.mxu0 0
    %850 = vmatpush1.bf16.msra.mxu0 0
    %851 = vmatprep.mubr.bf16.mxu0 0
    %852 = vmatmul.mubr.bf16.gmra.mrb[0].mxu0 %v766
    %v853 = vpop.f32.mrb[0].mxu0
    %v854 = vadd.f32 %v813, %v853
    %v855 = vpop.f32.mrb[0].mxu0
    %v856 = vadd.f32 %v815, %v855
    %v857 = vpop.f32.mrb[0].mxu0
    %v858 = vpop.f32.mrb[0].mxu0
    %859 = vdwg.mxu0
    %860 = vmatprep.subr.bf16.mxu0 0
    %861 = vmatpush1.bf16.msra.mxu0 %v667
    %862 = vmatprep.subr.bf16.mxu0 0
    %863 = vmatpush1.bf16.msra.mxu0 %v670
    %864 = vmatprep.subr.bf16.mxu0 0
    %865 = vmatpush1.bf16.msra.mxu0 %v673
    %866 = vmatprep.subr.bf16.mxu0 0
    %867 = vmatpush1.bf16.msra.mxu0 %v676
    %868 = vmatprep.subr.bf16.mxu0 0
    %869 = vmatpush1.bf16.msra.mxu0 %v679
    %870 = vmatprep.subr.bf16.mxu0 0
    %871 = vmatpush1.bf16.msra.mxu0 %v682
    %872 = vmatprep.subr.bf16.mxu0 0
    %873 = vmatpush1.bf16.msra.mxu0 %v685
    %874 = vmatprep.subr.bf16.mxu0 0
    %875 = vmatpush1.bf16.msra.mxu0 %v688
    %876 = vmatprep.subr.bf16.mxu0 0
    %877 = vmatpush1.bf16.msra.mxu0 %v691
    %878 = vmatprep.subr.bf16.mxu0 0
    %879 = vmatpush1.bf16.msra.mxu0 %v694
    %880 = vmatprep.subr.bf16.mxu0 0
    %881 = vmatpush1.bf16.msra.mxu0 %v697
    %882 = vmatprep.subr.bf16.mxu0 0
    %883 = vmatpush1.bf16.msra.mxu0 %v700
    %884 = vmatprep.subr.bf16.mxu0 0
    %885 = vmatpush1.bf16.msra.mxu0 %v703
    %886 = vmatprep.subr.bf16.mxu0 0
    %887 = vmatpush1.bf16.msra.mxu0 %v706
    %888 = vmatprep.subr.bf16.mxu0 0
    %889 = vmatpush1.bf16.msra.mxu0 %v709
    %890 = vmatprep.subr.bf16.mxu0 0
    %891 = vmatpush1.bf16.msra.mxu0 %v712
    %892 = vmatprep.mubr.bf16.mxu0 %v432
    %893 = vmatmul.mubr.bf16.gmra.mrb[0].mxu0 %v431
    %v894 = vpop.f32.mrb[0].mxu0
    %v895 = vadd.f32 0.0, %v894
    %v896 = vpop.f32.mrb[0].mxu0
    %v897 = vpop.f32.mrb[0].mxu0
    %v898 = vpop.f32.mrb[0].mxu0
    %899 = vdwg.mxu0
    %900 = vmatprep.subr.bf16.mxu0 0
    %901 = vmatpush1.bf16.msra.mxu0 %v776
    %902 = vmatprep.subr.bf16.mxu0 0
    %903 = vmatpush1.bf16.msra.mxu0 0
    %904 = vmatprep.subr.bf16.mxu0 0
    %905 = vmatpush1.bf16.msra.mxu0 0
    %906 = vmatprep.subr.bf16.mxu0 0
    %907 = vmatpush1.bf16.msra.mxu0 0
    %908 = vmatprep.subr.bf16.mxu0 0
    %909 = vmatpush1.bf16.msra.mxu0 0
    %910 = vmatprep.subr.bf16.mxu0 0
    %911 = vmatpush1.bf16.msra.mxu0 0
    %912 = vmatprep.subr.bf16.mxu0 0
    %913 = vmatpush1.bf16.msra.mxu0 0
    %914 = vmatprep.subr.bf16.mxu0 0
    %915 = vmatpush1.bf16.msra.mxu0 0
    %916 = vmatprep.subr.bf16.mxu0 0
    %917 = vmatpush1.bf16.msra.mxu0 0
    %918 = vmatprep.subr.bf16.mxu0 0
    %919 = vmatpush1.bf16.msra.mxu0 0
    %920 = vmatprep.subr.bf16.mxu0 0
    %921 = vmatpush1.bf16.msra.mxu0 0
    %922 = vmatprep.subr.bf16.mxu0 0
    %923 = vmatpush1.bf16.msra.mxu0 0
    %924 = vmatprep.subr.bf16.mxu0 0
    %925 = vmatpush1.bf16.msra.mxu0 0
    %926 = vmatprep.subr.bf16.mxu0 0
    %927 = vmatpush1.bf16.msra.mxu0 0
    %928 = vmatprep.subr.bf16.mxu0 0
    %929 = vmatpush1.bf16.msra.mxu0 0
    %930 = vmatprep.subr.bf16.mxu0 0
    %931 = vmatpush1.bf16.msra.mxu0 0
    %932 = vmatprep.mubr.bf16.mxu0 0
    %933 = vmatmul.mubr.bf16.gmra.mrb[0].mxu0 %v766
    %v934 = vpop.f32.mrb[0].mxu0
    %v935 = vadd.f32 %v895, %v934
    %v936 = vpop.f32.mrb[0].mxu0
    %v937 = vpop.f32.mrb[0].mxu0
    %v938 = vpop.f32.mrb[0].mxu0
    %939 = vdwg.mxu0
    %v940 = vmax.f32 %v854, 0.0
    %v941 = vmax.f32 %v856, 0.0
    %v942 = vmax.f32 %v940, %v941
    %943 = vrot.lane.b32.xlu0 %v942, 64
    %v944 = vpop.permute.xlu0 %943
    %v945 = vmax.f32 %v942, %v944
    %946 = vrot.lane.b32.xlu0 %v945, 32
    %v947 = vpop.permute.xlu0 %946
    %v948 = vmax.f32 %v945, %v947
    %v949 = vld [vmem:[#allocation11] sm:$0xff]
    %v950 = vld [vmem:[#allocation11 + $0x8] sm:$0xff]
    %v951 = vld [vmem:[#allocation11 + $0x10] sm:$0xff]
    %v952 = vld [vmem:[#allocation11 + $0x18] sm:$0xff]
    %vm953 = vcmask 261120
    %v955 = vsel %vm953, %v948, 0
    %957 = vmatprep.subr.mxu0 0.0
    %958 = vmatpush1.msra.mxu0 %v949
    %959 = vmatprep.subr.mxu0 0.0
    %960 = vmatpush1.msra.mxu0 %v950
    %961 = vmatprep.subr.mxu0 0.0
    %962 = vmatpush1.msra.mxu0 %v951
    %963 = vmatprep.subr.mxu0 0.0
    %964 = vmatpush1.msra.mxu0 %v952
    %965 = vmatprep.subr.mxu0 0.0
    %966 = vmatpush1.msra.mxu0 0.0
    %967 = vmatprep.subr.mxu0 0.0
    %968 = vmatpush1.msra.mxu0 0.0
    %969 = vmatprep.subr.mxu0 0.0
    %970 = vmatpush1.msra.mxu0 0.0
    %971 = vmatprep.subr.mxu0 0.0
    %972 = vmatpush1.msra.mxu0 0.0
    %973 = vmatprep.subr.mxu0 0.0
    %974 = vmatpush1.msra.mxu0 0.0
    %975 = vmatprep.subr.mxu0 0.0
    %976 = vmatpush1.msra.mxu0 0.0
    %977 = vmatprep.subr.mxu0 0.0
    %978 = vmatpush1.msra.mxu0 0.0
    %979 = vmatprep.subr.mxu0 0.0
    %980 = vmatpush1.msra.mxu0 0.0
    %981 = vmatprep.subr.mxu0 0.0
    %982 = vmatpush1.msra.mxu0 0.0
    %983 = vmatprep.subr.mxu0 0.0
    %984 = vmatpush1.msra.mxu0 0.0
    %985 = vmatprep.subr.mxu0 0.0
    %986 = vmatpush1.msra.mxu0 0.0
    %987 = vmatprep.subr.mxu0 0.0
    %988 = vmatpush1.msra.mxu0 0.0
    %989 = vmatprep.subr.mxu0 0.0
    %990 = vmatpush1.msra.mxu0 0.0
    %991 = vmatprep.subr.mxu0 0.0
    %992 = vmatpush1.msra.mxu0 0.0
    %993 = vmatprep.subr.mxu0 0.0
    %994 = vmatpush1.msra.mxu0 0.0
    %995 = vmatprep.subr.mxu0 0.0
    %996 = vmatpush1.msra.mxu0 0.0
    %997 = vmatprep.subr.mxu0 0.0
    %998 = vmatpush1.msra.mxu0 0.0
    %999 = vmatprep.subr.mxu0 0.0
    %1000 = vmatpush1.msra.mxu0 0.0
    %1001 = vmatprep.subr.mxu0 0.0
    %1002 = vmatpush1.msra.mxu0 0.0
    %1003 = vmatprep.subr.mxu0 0.0
    %1004 = vmatpush1.msra.mxu0 0.0
    %1005 = vmatprep.subr.mxu0 0.0
    %1006 = vmatpush1.msra.mxu0 0.0
    %1007 = vmatprep.subr.mxu0 0.0
    %1008 = vmatpush1.msra.mxu0 0.0
    %1009 = vmatprep.subr.mxu0 0.0
    %1010 = vmatpush1.msra.mxu0 0.0
    %1011 = vmatprep.subr.mxu0 0.0
    %1012 = vmatpush1.msra.mxu0 0.0
    %1013 = vmatprep.subr.mxu0 0.0
    %1014 = vmatpush1.msra.mxu0 0.0
    %1015 = vmatprep.subr.mxu0 0.0
    %1016 = vmatpush1.msra.mxu0 0.0
    %1017 = vmatprep.subr.mxu0 0.0
    %1018 = vmatpush1.msra.mxu0 0.0
    %1019 = vmatprep.subr.mxu0 0.0
    %1020 = vmatpush1.msra.mxu0 0.0
    %1021 = vmatprep.mubr.f32.mxu0 0.0
    %1022 = vmatmul.mubr.f32.gmra.mrb[0].mxu0 %v955
    %v1023 = vpop.f32.mrb[0].mxu0
    %v1024 = vadd.f32 0.0, %v1023
    %v1025 = vpop.f32.mrb[0].mxu0
    %1026 = vdwg.mxu0
    %v1027 = vadd.f32 %v935, %v1024
    %v1028 = vmax.f32 %v1027, 0.0
    %vm1029 = vcmask 254976
    %1030 = vst.msk [vmem:[#allocation3] sm:$0x3] %vm1029, %v1028
    %v1031 = vld [vmem:[#allocation3] sm:$0x3]
    %v1032 = vld [vmem:[#allocation4] sm:$0xff]
    %v1033 = vld [vmem:[#allocation4 + $0x8] sm:$0xff]
    %v1034 = vld [vmem:[#allocation4 + $0x10] sm:$0xff]
    %v1035 = vld [vmem:[#allocation4 + $0x18] sm:$0xff]
    %v1036 = vld [vmem:[#allocation4 + $0x20] sm:$0xff]
    %v1037 = vld [vmem:[#allocation4 + $0x28] sm:$0xff]
    %v1038 = vld [vmem:[#allocation4 + $0x30] sm:$0xff]
    %v1039 = vld [vmem:[#allocation4 + $0x38] sm:$0xff]
    %v1040 = vld [vmem:[#allocation4 + $0x40] sm:$0xff]
    %v1041 = vld [vmem:[#allocation4 + $0x48] sm:$0xff]
    %v1042 = vld [vmem:[#allocation4 + $0x50] sm:$0xff]
    %v1043 = vld [vmem:[#allocation4 + $0x58] sm:$0xff]
    %v1044 = vld [vmem:[#allocation4 + $0x60] sm:$0xff]
    %v1045 = vld [vmem:[#allocation4 + $0x68] sm:$0xff]
    %v1046 = vld [vmem:[#allocation4 + $0x70] sm:$0xff]
    %v1047 = vld [vmem:[#allocation4 + $0x78] sm:$0xff]
    %1048 = vmatprep.subr.mxu0 0.0
    %1049 = vmatpush1.xpose.msra.mxu0 %v1032
    %1050 = vmatprep.subr.mxu0 0.0
    %1051 = vmatpush1.xpose.msra.mxu0 %v1033
    %1052 = vmatprep.subr.mxu0 0.0
    %1053 = vmatpush1.xpose.msra.mxu0 %v1034
    %1054 = vmatprep.subr.mxu0 0.0
    %1055 = vmatpush1.xpose.msra.mxu0 %v1035
    %1056 = vmatprep.subr.mxu0 0.0
    %1057 = vmatpush1.xpose.msra.mxu0 %v1036
    %1058 = vmatprep.subr.mxu0 0.0
    %1059 = vmatpush1.xpose.msra.mxu0 %v1037
    %1060 = vmatprep.subr.mxu0 0.0
    %1061 = vmatpush1.xpose.msra.mxu0 %v1038
    %1062 = vmatprep.subr.mxu0 0.0
    %1063 = vmatpush1.xpose.msra.mxu0 %v1039
    %1064 = vmatprep.subr.mxu0 0.0
    %1065 = vmatpush1.xpose.msra.mxu0 %v1040
    %1066 = vmatprep.subr.mxu0 0.0
    %1067 = vmatpush1.xpose.msra.mxu0 %v1041
    %1068 = vmatprep.subr.mxu0 0.0
    %1069 = vmatpush1.xpose.msra.mxu0 %v1042
    %1070 = vmatprep.subr.mxu0 0.0
    %1071 = vmatpush1.xpose.msra.mxu0 %v1043
    %1072 = vmatprep.subr.mxu0 0.0
    %1073 = vmatpush1.xpose.msra.mxu0 %v1044
    %1074 = vmatprep.subr.mxu0 0.0
    %1075 = vmatpush1.xpose.msra.mxu0 %v1045
    %1076 = vmatprep.subr.mxu0 0.0
    %1077 = vmatpush1.xpose.msra.mxu0 %v1046
    %1078 = vmatprep.subr.mxu0 0.0
    %1079 = vmatpush1.xpose.msra.mxu0 %v1047
    %1080 = vmatprep.subr.mxu0 0.0
    %1081 = vmatpush1.xpose.msra.mxu0 0.0
    %1082 = vmatprep.subr.mxu0 0.0
    %1083 = vmatpush1.xpose.msra.mxu0 0.0
    %1084 = vmatprep.subr.mxu0 0.0
    %1085 = vmatpush1.xpose.msra.mxu0 0.0
    %1086 = vmatprep.subr.mxu0 0.0
    %1087 = vmatpush1.xpose.msra.mxu0 0.0
    %1088 = vmatprep.subr.mxu0 0.0
    %1089 = vmatpush1.xpose.msra.mxu0 0.0
    %1090 = vmatprep.subr.mxu0 0.0
    %1091 = vmatpush1.xpose.msra.mxu0 0.0
    %1092 = vmatprep.subr.mxu0 0.0
    %1093 = vmatpush1.xpose.msra.mxu0 0.0
    %1094 = vmatprep.subr.mxu0 0.0
    %1095 = vmatpush1.xpose.msra.mxu0 0.0
    %1096 = vmatprep.subr.mxu0 0.0
    %1097 = vmatpush1.xpose.msra.mxu0 0.0
    %1098 = vmatprep.subr.mxu0 0.0
    %1099 = vmatpush1.xpose.msra.mxu0 0.0
    %1100 = vmatprep.subr.mxu0 0.0
    %1101 = vmatpush1.xpose.msra.mxu0 0.0
    %1102 = vmatprep.subr.mxu0 0.0
    %1103 = vmatpush1.xpose.msra.mxu0 0.0
    %1104 = vmatprep.subr.mxu0 0.0
    %1105 = vmatpush1.xpose.msra.mxu0 0.0
    %1106 = vmatprep.subr.mxu0 0.0
    %1107 = vmatpush1.xpose.msra.mxu0 0.0
    %1108 = vmatprep.subr.mxu0 0.0
    %1109 = vmatpush1.xpose.msra.mxu0 0.0
    %1110 = vmatprep.subr.mxu0 0.0
    %1111 = vmatpush1.xpose.msra.mxu0 0.0
    %1112 = vmatprep.mubr.f32.mxu0 0.0
    %1113 = vmatmul.mubr.f32.gmra.mrb[0].mxu0 %v1031
    %v1114 = vpop.f32.mrb[0].mxu0
    %v1115 = vadd.f32 0.0, %v1114
    %v1116 = vpop.f32.mrb[0].mxu0
    %1117 = vdwg.mxu0
    %1118 = vst [vmem:[%s5] sm:$0x3] %v1115
    // Predicated region
    $region18: #{caser_forward.1} parent=1 // pred_check
      _
    $region19: #{caser_forward.1} parent=1 // pred_check_branch
      %1120 = sbr.rel (0) target = $region21
    $region20: #{caser_forward.1} parent=1 // pred_region
      _
    $region21: #{caser_forward.1} parent=1 // pred_fallthru
      _
    // Predicated region
    $region22: #{caser_forward.1} parent=1 // pred_check
      _
    $region23: #{caser_forward.1} parent=1 // pred_check_branch
      %1122 = sbr.rel (0) target = $region25
    $region24: #{caser_forward.1} parent=1 // pred_region
      _
    $region25: #{caser_forward.1} parent=1 // pred_fallthru
      _
    %1123 = vsyncpa [#allocation10], 1
    %1124 = vsyncpa [#allocation12], 1

</llo_original>
